<compile_context>
chip_gen: v5e
topology: v5e:2x2
jax: 0.10.0
libtpu: 0.0.40
codegen_flags: <defaults>
</compile_context>

<pallas_src>
import functools

import jax
import jax.numpy as jnp
from jax import lax
from jax.experimental import pallas as pl
from jax.experimental.pallas import tpu as pltpu

COV_ROWS = 150       # self.cov_n_rows in the torch module
BN_EPS = 1e-5        # torch BatchNorm1d default eps
PGD_ITERS = 300      # projected-gradient iterations for the QP
BISECT_ITERS = 28    # bisection iterations for the simplex/box projection
SAMPLE_BLOCK = 8     # samples per grid step (both kernels)


# --------------------------------------------------------------------------
# Kernel 1: batchnorm + linear_for_cov + relu   (tiled over sample rows)
# --------------------------------------------------------------------------
def _features_kernel(x_ref, mean_ref, var_ref, gamma_ref, beta_ref,
                     wcov_ref, bcov_ref, y_ref):
    x = x_ref[...]                                            # (TM, F)
    inv_std = lax.rsqrt(var_ref[...] + BN_EPS)                # (1, F)
    xb = (x - mean_ref[...]) * (gamma_ref[...] * inv_std) + beta_ref[...]
    # Dropout: identity in eval mode.
    y = jnp.dot(xb, wcov_ref[...], preferred_element_type=jnp.float32)
    y = y + bcov_ref[...]
    y_ref[...] = jnp.maximum(y, 0.0)                          # relu


# --------------------------------------------------------------------------
# Kernel 2: batched per-sample covariance + min-variance QP (with shorting)
# --------------------------------------------------------------------------
def _minvar_kernel(y_ref, w_ref):
    # y_ref: (B, A, K) relu activations (assets x observations per sample)
    # w_ref: (B, A)    portfolio weights
    bsz, a, k = y_ref.shape

    m = y_ref[...]                                            # (B, A, K)
    mc = m - jnp.mean(m, axis=2, keepdims=True)               # center over obs
    fact = 1.0 / (k - 1)
    # S_b = fact * Yc_b Yc_b^T, contracting the K observations (batched NT matmul)
    s = fact * jnp.einsum('bak,bck->bac', mc, mc,
                          preferred_element_type=jnp.float32)  # (B, A, A)

    # Since covmat_sqrt is the symmetric PSD sqrt of S, ||sqrt(S) w||^2 = w^T S w,
    # so the QP uses S directly (no matrix sqrt needed -- exact).

    ri = lax.broadcasted_iota(jnp.int32, (a, a), 0)
    ci = lax.broadcasted_iota(jnp.int32, (a, a), 1)
    eye = (ri == ci).astype(jnp.float32)                      # (A, A)

    diag = jnp.sum(s * eye[None, :, :], axis=2)               # (B, A)
    trace = jnp.sum(diag, axis=1, keepdims=True)              # (B, 1)
    eta = 1.0 / (2.0 * trace + 1e-6)                          # <= 1/L, safe step
    s2 = 2.0 * s                                              # hoisted (2*S)

    def project(v):
        # Euclidean projection onto {sum w = 1, -1 <= w <= 1} via bisection on
        # the shift lambda: w = clip(v - lambda, -1, 1).  Vectorized over B.
        lo = jnp.min(v, axis=1, keepdims=True) - 1.0          # f(lo) = +A >= 1
        hi = jnp.max(v, axis=1, keepdims=True) + 1.0          # f(hi) = -A <= 1

        def bis(_, carry):
            lo_c, hi_c = carry
            mid = 0.5 * (lo_c + hi_c)
            f = jnp.sum(jnp.clip(v - mid, -1.0, 1.0), axis=1, keepdims=True)
            pred = f > 1.0
            return jnp.where(pred, mid, lo_c), jnp.where(pred, hi_c, mid)

        lo, hi = lax.fori_loop(0, BISECT_ITERS, bis, (lo, hi), unroll=True)
        lam = 0.5 * (lo + hi)
        return jnp.clip(v - lam, -1.0, 1.0)

    w0 = jnp.full((bsz, a), 1.0 / a, dtype=jnp.float32)

    def pgd(_, w):
        # gradient of w^T S w is 2 S w; keep the tiny mat-vec on the VPU/XLU.
        g = jnp.sum(s2 * w[:, None, :], axis=2)               # (B, A)
        return project(w - eta * g)

    w = lax.fori_loop(0, PGD_ITERS, pgd, w0)
    w_ref[...] = w


# --------------------------------------------------------------------------
# Wrapper
# --------------------------------------------------------------------------
@functools.partial(jax.jit, static_argnames=("n_assets",))
def dense_net_min_var(x, params, *, n_assets):
    n_samples = x.shape[0]
    n_features = x.shape[1] * x.shape[2] * x.shape[3]
    out_cols = COV_ROWS * n_assets

    x_flat = x.reshape(n_samples, n_features).astype(jnp.float32)

    blk = SAMPLE_BLOCK
    n_pad = ((n_samples + blk - 1) // blk) * blk
    if n_pad != n_samples:
        x_flat = jnp.pad(x_flat, ((0, n_pad - n_samples), (0, 0)))

    def row(p):  # (F,) -> (1, F) etc. for clean 2D VMEM layout
        return p.reshape(1, -1)

    # Permute linear_for_cov outputs from (K, A) to (A, K) ordering so the
    # activation reshapes straight to (N, A, K) with no transpose anywhere.
    w_cov_perm = jnp.transpose(
        params["w_cov"].reshape(COV_ROWS, n_assets, n_features), (1, 0, 2)
    ).reshape(out_cols, n_features)
    w_cov_t = w_cov_perm.T                                     # (F, A*K)
    b_cov_p = params["b_cov"].reshape(COV_ROWS, n_assets).T.reshape(1, -1)

    y = pl.pallas_call(
        _features_kernel,
        out_shape=jax.ShapeDtypeStruct((n_pad, out_cols), jnp.float32),
        grid=(n_pad // blk,),
        in_specs=[
            pl.BlockSpec((blk, n_features), lambda i: (i, 0)),
            pl.BlockSpec((1, n_features), lambda i: (0, 0)),
            pl.BlockSpec((1, n_features), lambda i: (0, 0)),
            pl.BlockSpec((1, n_features), lambda i: (0, 0)),
            pl.BlockSpec((1, n_features), lambda i: (0, 0)),
            pl.BlockSpec((n_features, out_cols), lambda i: (0, 0)),
            pl.BlockSpec((1, out_cols), lambda i: (0, 0)),
        ],
        out_specs=pl.BlockSpec((blk, out_cols), lambda i: (i, 0)),
        compiler_params=pltpu.CompilerParams(
            dimension_semantics=("parallel",),
            vmem_limit_bytes=32 * 1024 * 1024),
    )(x_flat, row(params["bn_mean"]), row(params["bn_var"]),
      row(params["bn_gamma"]), row(params["bn_beta"]),
      w_cov_t, b_cov_p)

    # Free (row-major compatible) reshape to (N, A, K): observations on lanes.
    y3 = y.reshape(n_pad, n_assets, COV_ROWS)

    w = pl.pallas_call(
        _minvar_kernel,
        out_shape=jax.ShapeDtypeStruct((n_pad, n_assets), jnp.float32),
        grid=(n_pad // blk,),
        in_specs=[
            pl.BlockSpec((blk, n_assets, COV_ROWS), lambda i: (i, 0, 0)),
        ],
        out_specs=pl.BlockSpec((blk, n_assets), lambda i: (i, 0)),
        compiler_params=pltpu.CompilerParams(
            dimension_semantics=("parallel",)),
    )(y3)

    return w[:n_samples]


# --------------------------------------------------------------------------
# Deterministic parameter construction (mirrors the torch __init__ shapes)
# --------------------------------------------------------------------------
def make_params(key, n_channels, lookback, n_assets):
    f = n_channels * lookback * n_assets
    out_cov = COV_ROWS * n_assets
    ks = jax.random.split(key, 6)
    kaiming_bound = (6.0 / f) ** 0.5          # kaiming_uniform-style bound
    bias_bound = 1.0 / (f ** 0.5)             # torch Linear default bias init
    return {
        "bn_gamma": jnp.ones((f,), jnp.float32),
        "bn_beta": jnp.zeros((f,), jnp.float32),
        "bn_mean": 0.1 * jax.random.normal(ks[0], (f,), jnp.float32),
        "bn_var": jax.random.uniform(ks[1], (f,), jnp.float32, 0.5, 1.5),
        "w_cov": jax.random.uniform(ks[2], (out_cov, f), jnp.float32,
                                    -kaiming_bound, kaiming_bound),
        "b_cov": jax.random.uniform(ks[3], (out_cov,), jnp.float32,
                                    -bias_bound, bias_bound),
    }


if __name__ == "__main__":
    n_samples, n_channels, lookback, n_assets = 16, 2, 8, 8   # F = 128
    key = jax.random.PRNGKey(0)
    k_x, k_p = jax.random.split(key)
    x = jax.random.normal(
        k_x, (n_samples, n_channels, lookback, n_assets), jnp.float32)
    params = make_params(k_p, n_channels, lookback, n_assets)

    weights = dense_net_min_var(x, params, n_assets=n_assets)
    weights = jax.block_until_ready(weights)

    assert weights.shape == (n_samples, n_assets)
    assert bool(jnp.all(jnp.isfinite(weights)))
    # budget constraint sum(w)=1 enforced by the projection (to bisection tol)
    assert bool(jnp.all(jnp.abs(jnp.sum(weights, axis=1) - 1.0) < 1e-2))
    print("KERNEL_OK")
</pallas_src>

<mosaic_0001>
module attributes {stable_mosaic.version = 11 : i64} {
  func.func @_features_kernel(%arg0: i32, %arg1: memref<8x128xf32, #tpu.memory_space<vmem>>, %arg2: memref<1x128xf32, #tpu.memory_space<vmem>>, %arg3: memref<1x128xf32, #tpu.memory_space<vmem>>, %arg4: memref<1x128xf32, #tpu.memory_space<vmem>>, %arg5: memref<1x128xf32, #tpu.memory_space<vmem>>, %arg6: memref<128x1200xf32, #tpu.memory_space<vmem>>, %arg7: memref<1x1200xf32, #tpu.memory_space<vmem>>, %arg8: memref<8x1200xf32, #tpu.memory_space<vmem>>) attributes {dimension_semantics = [#tpu.dimension_semantics<parallel>], iteration_bounds = array<i64: 2>, scalar_prefetch = 0 : i64, scratch_operands = 0 : i64, tpu.core_type = #tpu.core_type<tc>, window_params = [{transform_indices = @transform_0, window_bounds = array<i64: 8, 128>}, {pipeline_mode = #tpu.pipeline_mode<synchronous>, transform_indices = @transform_1, window_bounds = array<i64: 1, 128>}, {pipeline_mode = #tpu.pipeline_mode<synchronous>, transform_indices = @transform_2, window_bounds = array<i64: 1, 128>}, {pipeline_mode = #tpu.pipeline_mode<synchronous>, transform_indices = @transform_3, window_bounds = array<i64: 1, 128>}, {pipeline_mode = #tpu.pipeline_mode<synchronous>, transform_indices = @transform_4, window_bounds = array<i64: 1, 128>}, {pipeline_mode = #tpu.pipeline_mode<synchronous>, transform_indices = @transform_5, window_bounds = array<i64: 128, 1200>}, {pipeline_mode = #tpu.pipeline_mode<synchronous>, transform_indices = @transform_6, window_bounds = array<i64: 1, 1200>}, {transform_indices = @transform_7, window_bounds = array<i64: 8, 1200>}]} {
    %c0 = arith.constant 0 : index
    %c0_0 = arith.constant 0 : index
    %0 = vector.load %arg1[%c0, %c0_0] : memref<8x128xf32, #tpu.memory_space<vmem>>, vector<8x128xf32>
    %c0_1 = arith.constant 0 : index
    %c0_2 = arith.constant 0 : index
    %1 = vector.load %arg3[%c0_1, %c0_2] : memref<1x128xf32, #tpu.memory_space<vmem>>, vector<1x128xf32>
    %cst = arith.constant 9.99999974E-6 : f32
    %2 = vector.broadcast %cst : f32 to vector<1x128xf32>
    %3 = arith.addf %1, %2 : vector<1x128xf32>
    %4 = math.rsqrt %3 : vector<1x128xf32>
    %c0_3 = arith.constant 0 : index
    %c0_4 = arith.constant 0 : index
    %5 = vector.load %arg2[%c0_3, %c0_4] : memref<1x128xf32, #tpu.memory_space<vmem>>, vector<1x128xf32>
    %6 = vector.broadcast %5 : vector<1x128xf32> to vector<8x128xf32>
    %7 = arith.subf %0, %6 : vector<8x128xf32>
    %c0_5 = arith.constant 0 : index
    %c0_6 = arith.constant 0 : index
    %8 = vector.load %arg4[%c0_5, %c0_6] : memref<1x128xf32, #tpu.memory_space<vmem>>, vector<1x128xf32>
    %9 = arith.mulf %8, %4 : vector<1x128xf32>
    %10 = vector.broadcast %9 : vector<1x128xf32> to vector<8x128xf32>
    %11 = arith.mulf %7, %10 : vector<8x128xf32>
    %c0_7 = arith.constant 0 : index
    %c0_8 = arith.constant 0 : index
    %12 = vector.load %arg5[%c0_7, %c0_8] : memref<1x128xf32, #tpu.memory_space<vmem>>, vector<1x128xf32>
    %13 = vector.broadcast %12 : vector<1x128xf32> to vector<8x128xf32>
    %14 = arith.addf %11, %13 : vector<8x128xf32>
    %c0_9 = arith.constant 0 : index
    %c0_10 = arith.constant 0 : index
    %15 = vector.load %arg6[%c0_9, %c0_10] : memref<128x1200xf32, #tpu.memory_space<vmem>>, vector<128x1200xf32>
    %cst_11 = arith.constant dense<0.000000e+00> : vector<8x1200xf32>
    %16 = tpu.matmul %14, %15, %cst_11 {dimension_numbers = #tpu.dot_dimension_numbers<[1], [0], [0], [1], [0, 0, 1, 1], [], []>} : vector<8x128xf32>, vector<128x1200xf32>, vector<8x1200xf32> -> vector<8x1200xf32>
    %c0_12 = arith.constant 0 : index
    %c0_13 = arith.constant 0 : index
    %17 = vector.load %arg7[%c0_12, %c0_13] : memref<1x1200xf32, #tpu.memory_space<vmem>>, vector<1x1200xf32>
    %18 = vector.broadcast %17 : vector<1x1200xf32> to vector<8x1200xf32>
    %19 = arith.addf %16, %18 : vector<8x1200xf32>
    %cst_14 = arith.constant 0.000000e+00 : f32
    %20 = vector.broadcast %cst_14 : f32 to vector<8x1200xf32>
    %21 = arith.maximumf %19, %20 : vector<8x1200xf32>
    %c0_15 = arith.constant 0 : index
    %c0_16 = arith.constant 0 : index
    %22 = vector.load %arg8[%c0_15, %c0_16] : memref<8x1200xf32, #tpu.memory_space<vmem>>, vector<8x1200xf32>
    tpu.vector_store %arg8[%c0_15, %c0_16], %21 {strides = array<i32>} : memref<8x1200xf32, #tpu.memory_space<vmem>>, vector<8x1200xf32>,
    return
  }
  func.func @transform_0(%arg0: i32) -> (i32, i32) {
    %c0_i32 = arith.constant 0 : i32
    %c0_i32_0 = arith.constant 0 : i32
    return %arg0, %c0_i32 : i32, i32
  }
  func.func @transform_1(%arg0: i32) -> (i32, i32) {
    %c0_i32 = arith.constant 0 : i32
    %c0_i32_0 = arith.constant 0 : i32
    %c0_i32_1 = arith.constant 0 : i32
    return %c0_i32, %c0_i32_0 : i32, i32
  }
  func.func @transform_2(%arg0: i32) -> (i32, i32) {
    %c0_i32 = arith.constant 0 : i32
    %c0_i32_0 = arith.constant 0 : i32
    %c0_i32_1 = arith.constant 0 : i32
    return %c0_i32, %c0_i32_0 : i32, i32
  }
  func.func @transform_3(%arg0: i32) -> (i32, i32) {
    %c0_i32 = arith.constant 0 : i32
    %c0_i32_0 = arith.constant 0 : i32
    %c0_i32_1 = arith.constant 0 : i32
    return %c0_i32, %c0_i32_0 : i32, i32
  }
  func.func @transform_4(%arg0: i32) -> (i32, i32) {
    %c0_i32 = arith.constant 0 : i32
    %c0_i32_0 = arith.constant 0 : i32
    %c0_i32_1 = arith.constant 0 : i32
    return %c0_i32, %c0_i32_0 : i32, i32
  }
  func.func @transform_5(%arg0: i32) -> (i32, i32) {
    %c0_i32 = arith.constant 0 : i32
    %c0_i32_0 = arith.constant 0 : i32
    %c0_i32_1 = arith.constant 0 : i32
    return %c0_i32, %c0_i32_0 : i32, i32
  }
  func.func @transform_6(%arg0: i32) -> (i32, i32) {
    %c0_i32 = arith.constant 0 : i32
    %c0_i32_0 = arith.constant 0 : i32
    %c0_i32_1 = arith.constant 0 : i32
    return %c0_i32, %c0_i32_0 : i32, i32
  }
  func.func @transform_7(%arg0: i32) -> (i32, i32) {
    %c0_i32 = arith.constant 0 : i32
    %c0_i32_0 = arith.constant 0 : i32
    return %arg0, %c0_i32 : i32, i32
  }
}

module attributes {stable_mosaic.version = 11 : i64} {
  func.func @_minvar_kernel(%arg0: i32, %arg1: memref<8x8x150xf32, #tpu.memory_space<vmem>>, %arg2: memref<8x8xf32, #tpu.memory_space<vmem>>) attributes {dimension_semantics = [#tpu.dimension_semantics<parallel>], iteration_bounds = array<i64: 2>, scalar_prefetch = 0 : i64, scratch_operands = 0 : i64, tpu.core_type = #tpu.core_type<tc>, window_params = [{transform_indices = @transform_0, window_bounds = array<i64: 8, 8, 150>}, {transform_indices = @transform_1, window_bounds = array<i64: 8, 8>}]} {
    %c0 = arith.constant 0 : index
    %c0_0 = arith.constant 0 : index
    %c0_1 = arith.constant 0 : index
    %0 = vector.load %arg1[%c0, %c0_0, %c0_1] : memref<8x8x150xf32, #tpu.memory_space<vmem>>, vector<8x8x150xf32>
    %cst = arith.constant dense<0.000000e+00> : vector<8x8xf32>
    %1 = vector.multi_reduction <add>, %0, %cst [2] : vector<8x8x150xf32> to vector<8x8xf32>
    %2 = vector.shape_cast %1 : vector<8x8xf32> to vector<8x8x1xf32>
    %cst_2 = arith.constant 1.500000e+02 : f32
    %3 = vector.broadcast %cst_2 : f32 to vector<8x8x1xf32>
    %4 = arith.divf %2, %3 : vector<8x8x1xf32>
    %5 = vector.broadcast %4 : vector<8x8x1xf32> to vector<8x8x150xf32>
    %6 = arith.subf %0, %5 : vector<8x8x150xf32>
    "tpu.trace_start"() <{level = 10 : i32, message = "bak,bck->bac"}> : () -> ()
    %cst_3 = arith.constant dense<0.000000e+00> : vector<8x8x8xf32>
    %7 = tpu.matmul %6, %6, %cst_3 {dimension_numbers = #tpu.dot_dimension_numbers<[2], [2], [1], [1], [0, 0, 0, 1, 1, 1], [0], [0]>} : vector<8x8x150xf32>, vector<8x8x150xf32>, vector<8x8x8xf32> -> vector<8x8x8xf32>
    "tpu.trace_stop"() : () -> ()
    %cst_4 = arith.constant 0.00671140943 : f32
    %8 = vector.broadcast %cst_4 : f32 to vector<8x8x8xf32>
    %9 = arith.mulf %8, %7 : vector<8x8x8xf32>
    %10 = tpu.iota {dimensions = array<i32: 0>} : vector<8x8xi32>
    %11 = tpu.iota {dimensions = array<i32: 1>} : vector<8x8xi32>
    %12 = arith.cmpi eq, %10, %11 : vector<8x8xi32>
    %13 = arith.extui %12 : vector<8x8xi1> to vector<8x8xi32>
    %14 = arith.sitofp %13 : vector<8x8xi32> to vector<8x8xf32>
    %15 = vector.shape_cast %14 : vector<8x8xf32> to vector<1x8x8xf32>
    %16 = vector.broadcast %15 : vector<1x8x8xf32> to vector<8x8x8xf32>
    %17 = arith.mulf %9, %16 : vector<8x8x8xf32>
    %cst_5 = arith.constant dense<0.000000e+00> : vector<8x8xf32>
    %18 = vector.multi_reduction <add>, %17, %cst_5 [2] : vector<8x8x8xf32> to vector<8x8xf32>
    %cst_6 = arith.constant dense<0.000000e+00> : vector<8xf32>
    %19 = vector.multi_reduction <add>, %18, %cst_6 [1] : vector<8x8xf32> to vector<8xf32>
    %20 = vector.shape_cast %19 : vector<8xf32> to vector<8x1xf32>
    %cst_7 = arith.constant 2.000000e+00 : f32
    %21 = vector.broadcast %cst_7 : f32 to vector<8x1xf32>
    %22 = arith.mulf %21, %20 : vector<8x1xf32>
    %cst_8 = arith.constant 9.99999997E-7 : f32
    %23 = vector.broadcast %cst_8 : f32 to vector<8x1xf32>
    %24 = arith.addf %22, %23 : vector<8x1xf32>
    %cst_9 = arith.constant 1.000000e+00 : f32
    %25 = vector.broadcast %cst_9 : f32 to vector<8x1xf32>
    %26 = arith.divf %25, %24 : vector<8x1xf32>
    %cst_10 = arith.constant 2.000000e+00 : f32
    %27 = vector.broadcast %cst_10 : f32 to vector<8x8x8xf32>
    %28 = arith.mulf %27, %9 : vector<8x8x8xf32>
    %cst_11 = arith.constant 1.250000e-01 : f32
    %29 = vector.broadcast %cst_11 : f32 to vector<8x8xf32>
    %c0_i32 = arith.constant 0 : i32
    %c300_i32 = arith.constant 300 : i32
    %30 = arith.addi %c0_i32, %c300_i32 : i32
    %c1_i32 = arith.constant 1 : i32
    %31 = scf.for %arg3 = %c0_i32 to %30 step %c1_i32 iter_args(%arg4 = %29) -> (vector<8x8xf32>)  : i32 {
      %33 = vector.shape_cast %arg4 : vector<8x8xf32> to vector<8x1x8xf32>
      %34 = vector.broadcast %33 : vector<8x1x8xf32> to vector<8x8x8xf32>
      %35 = arith.mulf %28, %34 : vector<8x8x8xf32>
      %cst_14 = arith.constant dense<0.000000e+00> : vector<8x8xf32>
      %36 = vector.multi_reduction <add>, %35, %cst_14 [2] : vector<8x8x8xf32> to vector<8x8xf32>
      %37 = vector.broadcast %26 : vector<8x1xf32> to vector<8x8xf32>
      %38 = arith.mulf %37, %36 : vector<8x8xf32>
      %39 = arith.subf %arg4, %38 : vector<8x8xf32>
      %cst_15 = arith.constant dense<0x7F800000> : vector<8xf32>
      %40 = vector.multi_reduction <minimumf>, %39, %cst_15 [1] : vector<8x8xf32> to vector<8xf32>
      %41 = vector.shape_cast %40 : vector<8xf32> to vector<8x1xf32>
      %cst_16 = arith.constant 1.000000e+00 : f32
      %42 = vector.broadcast %cst_16 : f32 to vector<8x1xf32>
      %43 = arith.subf %41, %42 : vector<8x1xf32>
      %cst_17 = arith.constant dense<0xFF800000> : vector<8xf32>
      %44 = vector.multi_reduction <maximumf>, %39, %cst_17 [1] : vector<8x8xf32> to vector<8xf32>
      %45 = vector.shape_cast %44 : vector<8xf32> to vector<8x1xf32>
      %cst_18 = arith.constant 1.000000e+00 : f32
      %46 = vector.broadcast %cst_18 : f32 to vector<8x1xf32>
      %47 = arith.addf %45, %46 : vector<8x1xf32>
      %c0_i32_19 = arith.constant 0 : i32
      %48 = arith.addf %43, %47 : vector<8x1xf32>
      %cst_20 = arith.constant 5.000000e-01 : f32
      %49 = vector.broadcast %cst_20 : f32 to vector<8x1xf32>
      %50 = arith.mulf %49, %48 : vector<8x1xf32>
      %51 = vector.broadcast %50 : vector<8x1xf32> to vector<8x8xf32>
      %52 = arith.subf %39, %51 : vector<8x8xf32>
      %cst_21 = arith.constant -1.000000e+00 : f32
      %cst_22 = arith.constant 1.000000e+00 : f32
      %53 = vector.broadcast %cst_21 : f32 to vector<8x8xf32>
      %54 = arith.maximumf %53, %52 : vector<8x8xf32>
      %55 = vector.broadcast %cst_22 : f32 to vector<8x8xf32>
      %56 = arith.minimumf %55, %54 : vector<8x8xf32>
      %cst_23 = arith.constant dense<0.000000e+00> : vector<8xf32>
      %57 = vector.multi_reduction <add>, %56, %cst_23 [1] : vector<8x8xf32> to vector<8xf32>
      %58 = vector.shape_cast %57 : vector<8xf32> to vector<8x1xf32>
      %cst_24 = arith.constant 1.000000e+00 : f32
      %59 = vector.broadcast %cst_24 : f32 to vector<8x1xf32>
      %60 = arith.cmpf ogt, %58, %59 : vector<8x1xf32>
      %61 = arith.select %60, %50, %43 : vector<8x1xi1>, vector<8x1xf32>
      %62 = arith.select %60, %47, %50 : vector<8x1xi1>, vector<8x1xf32>
      %c1_i32_25 = arith.constant 1 : i32
      %63 = arith.addf %61, %62 : vector<8x1xf32>
      %cst_26 = arith.constant 5.000000e-01 : f32
      %64 = vector.broadcast %cst_26 : f32 to vector<8x1xf32>
      %65 = arith.mulf %64, %63 : vector<8x1xf32>
      %66 = vector.broadcast %65 : vector<8x1xf32> to vector<8x8xf32>
      %67 = arith.subf %39, %66 : vector<8x8xf32>
      %cst_27 = arith.constant -1.000000e+00 : f32
      %cst_28 = arith.constant 1.000000e+00 : f32
      %68 = vector.broadcast %cst_27 : f32 to vector<8x8xf32>
      %69 = arith.maximumf %68, %67 : vector<8x8xf32>
      %70 = vector.broadcast %cst_28 : f32 to vector<8x8xf32>
      %71 = arith.minimumf %70, %69 : vector<8x8xf32>
      %cst_29 = arith.constant dense<0.000000e+00> : vector<8xf32>
      %72 = vector.multi_reduction <add>, %71, %cst_29 [1] : vector<8x8xf32> to vector<8xf32>
      %73 = vector.shape_cast %72 : vector<8xf32> to vector<8x1xf32>
      %cst_30 = arith.constant 1.000000e+00 : f32
      %74 = vector.broadcast %cst_30 : f32 to vector<8x1xf32>
      %75 = arith.cmpf ogt, %73, %74 : vector<8x1xf32>
      %76 = arith.select %75, %65, %61 : vector<8x1xi1>, vector<8x1xf32>
      %77 = arith.select %75, %62, %65 : vector<8x1xi1>, vector<8x1xf32>
      %c2_i32 = arith.constant 2 : i32
      %78 = arith.addf %76, %77 : vector<8x1xf32>
      %cst_31 = arith.constant 5.000000e-01 : f32
      %79 = vector.broadcast %cst_31 : f32 to vector<8x1xf32>
      %80 = arith.mulf %79, %78 : vector<8x1xf32>
      %81 = vector.broadcast %80 : vector<8x1xf32> to vector<8x8xf32>
      %82 = arith.subf %39, %81 : vector<8x8xf32>
      %cst_32 = arith.constant -1.000000e+00 : f32
      %cst_33 = arith.constant 1.000000e+00 : f32
      %83 = vector.broadcast %cst_32 : f32 to vector<8x8xf32>
      %84 = arith.maximumf %83, %82 : vector<8x8xf32>
      %85 = vector.broadcast %cst_33 : f32 to vector<8x8xf32>
      %86 = arith.minimumf %85, %84 : vector<8x8xf32>
      %cst_34 = arith.constant dense<0.000000e+00> : vector<8xf32>
      %87 = vector.multi_reduction <add>, %86, %cst_34 [1] : vector<8x8xf32> to vector<8xf32>
      %88 = vector.shape_cast %87 : vector<8xf32> to vector<8x1xf32>
      %cst_35 = arith.constant 1.000000e+00 : f32
      %89 = vector.broadcast %cst_35 : f32 to vector<8x1xf32>
      %90 = arith.cmpf ogt, %88, %89 : vector<8x1xf32>
      %91 = arith.select %90, %80, %76 : vector<8x1xi1>, vector<8x1xf32>
      %92 = arith.select %90, %77, %80 : vector<8x1xi1>, vector<8x1xf32>
      %c3_i32 = arith.constant 3 : i32
      %93 = arith.addf %91, %92 : vector<8x1xf32>
      %cst_36 = arith.constant 5.000000e-01 : f32
      %94 = vector.broadcast %cst_36 : f32 to vector<8x1xf32>
      %95 = arith.mulf %94, %93 : vector<8x1xf32>
      %96 = vector.broadcast %95 : vector<8x1xf32> to vector<8x8xf32>
      %97 = arith.subf %39, %96 : vector<8x8xf32>
      %cst_37 = arith.constant -1.000000e+00 : f32
      %cst_38 = arith.constant 1.000000e+00 : f32
      %98 = vector.broadcast %cst_37 : f32 to vector<8x8xf32>
      %99 = arith.maximumf %98, %97 : vector<8x8xf32>
      %100 = vector.broadcast %cst_38 : f32 to vector<8x8xf32>
      %101 = arith.minimumf %100, %99 : vector<8x8xf32>
      %cst_39 = arith.constant dense<0.000000e+00> : vector<8xf32>
      %102 = vector.multi_reduction <add>, %101, %cst_39 [1] : vector<8x8xf32> to vector<8xf32>
      %103 = vector.shape_cast %102 : vector<8xf32> to vector<8x1xf32>
      %cst_40 = arith.constant 1.000000e+00 : f32
      %104 = vector.broadcast %cst_40 : f32 to vector<8x1xf32>
      %105 = arith.cmpf ogt, %103, %104 : vector<8x1xf32>
      %106 = arith.select %105, %95, %91 : vector<8x1xi1>, vector<8x1xf32>
      %107 = arith.select %105, %92, %95 : vector<8x1xi1>, vector<8x1xf32>
      %c4_i32 = arith.constant 4 : i32
      %108 = arith.addf %106, %107 : vector<8x1xf32>
      %cst_41 = arith.constant 5.000000e-01 : f32
      %109 = vector.broadcast %cst_41 : f32 to vector<8x1xf32>
      %110 = arith.mulf %109, %108 : vector<8x1xf32>
      %111 = vector.broadcast %110 : vector<8x1xf32> to vector<8x8xf32>
      %112 = arith.subf %39, %111 : vector<8x8xf32>
      %cst_42 = arith.constant -1.000000e+00 : f32
      %cst_43 = arith.constant 1.000000e+00 : f32
      %113 = vector.broadcast %cst_42 : f32 to vector<8x8xf32>
      %114 = arith.maximumf %113, %112 : vector<8x8xf32>
      %115 = vector.broadcast %cst_43 : f32 to vector<8x8xf32>
      %116 = arith.minimumf %115, %114 : vector<8x8xf32>
      %cst_44 = arith.constant dense<0.000000e+00> : vector<8xf32>
      %117 = vector.multi_reduction <add>, %116, %cst_44 [1] : vector<8x8xf32> to vector<8xf32>
      %118 = vector.shape_cast %117 : vector<8xf32> to vector<8x1xf32>
      %cst_45 = arith.constant 1.000000e+00 : f32
      %119 = vector.broadcast %cst_45 : f32 to vector<8x1xf32>
      %120 = arith.cmpf ogt, %118, %119 : vector<8x1xf32>
      %121 = arith.select %120, %110, %106 : vector<8x1xi1>, vector<8x1xf32>
      %122 = arith.select %120, %107, %110 : vector<8x1xi1>, vector<8x1xf32>
      %c5_i32 = arith.constant 5 : i32
      %123 = arith.addf %121, %122 : vector<8x1xf32>
      %cst_46 = arith.constant 5.000000e-01 : f32
      %124 = vector.broadcast %cst_46 : f32 to vector<8x1xf32>
      %125 = arith.mulf %124, %123 : vector<8x1xf32>
      %126 = vector.broadcast %125 : vector<8x1xf32> to vector<8x8xf32>
      %127 = arith.subf %39, %126 : vector<8x8xf32>
      %cst_47 = arith.constant -1.000000e+00 : f32
      %cst_48 = arith.constant 1.000000e+00 : f32
      %128 = vector.broadcast %cst_47 : f32 to vector<8x8xf32>
      %129 = arith.maximumf %128, %127 : vector<8x8xf32>
      %130 = vector.broadcast %cst_48 : f32 to vector<8x8xf32>
      %131 = arith.minimumf %130, %129 : vector<8x8xf32>
      %cst_49 = arith.constant dense<0.000000e+00> : vector<8xf32>
      %132 = vector.multi_reduction <add>, %131, %cst_49 [1] : vector<8x8xf32> to vector<8xf32>
      %133 = vector.shape_cast %132 : vector<8xf32> to vector<8x1xf32>
      %cst_50 = arith.constant 1.000000e+00 : f32
      %134 = vector.broadcast %cst_50 : f32 to vector<8x1xf32>
      %135 = arith.cmpf ogt, %133, %134 : vector<8x1xf32>
      %136 = arith.select %135, %125, %121 : vector<8x1xi1>, vector<8x1xf32>
      %137 = arith.select %135, %122, %125 : vector<8x1xi1>, vector<8x1xf32>
      %c6_i32 = arith.constant 6 : i32
      %138 = arith.addf %136, %137 : vector<8x1xf32>
      %cst_51 = arith.constant 5.000000e-01 : f32
      %139 = vector.broadcast %cst_51 : f32 to vector<8x1xf32>
      %140 = arith.mulf %139, %138 : vector<8x1xf32>
      %141 = vector.broadcast %140 : vector<8x1xf32> to vector<8x8xf32>
      %142 = arith.subf %39, %141 : vector<8x8xf32>
      %cst_52 = arith.constant -1.000000e+00 : f32
      %cst_53 = arith.constant 1.000000e+00 : f32
      %143 = vector.broadcast %cst_52 : f32 to vector<8x8xf32>
      %144 = arith.maximumf %143, %142 : vector<8x8xf32>
      %145 = vector.broadcast %cst_53 : f32 to vector<8x8xf32>
      %146 = arith.minimumf %145, %144 : vector<8x8xf32>
      %cst_54 = arith.constant dense<0.000000e+00> : vector<8xf32>
      %147 = vector.multi_reduction <add>, %146, %cst_54 [1] : vector<8x8xf32> to vector<8xf32>
      %148 = vector.shape_cast %147 : vector<8xf32> to vector<8x1xf32>
      %cst_55 = arith.constant 1.000000e+00 : f32
      %149 = vector.broadcast %cst_55 : f32 to vector<8x1xf32>
      %150 = arith.cmpf ogt, %148, %149 : vector<8x1xf32>
      %151 = arith.select %150, %140, %136 : vector<8x1xi1>, vector<8x1xf32>
      %152 = arith.select %150, %137, %140 : vector<8x1xi1>, vector<8x1xf32>
      %c7_i32 = arith.constant 7 : i32
      %153 = arith.addf %151, %152 : vector<8x1xf32>
      %cst_56 = arith.constant 5.000000e-01 : f32
      %154 = vector.broadcast %cst_56 : f32 to vector<8x1xf32>
      %155 = arith.mulf %154, %153 : vector<8x1xf32>
      %156 = vector.broadcast %155 : vector<8x1xf32> to vector<8x8xf32>
      %157 = arith.subf %39, %156 : vector<8x8xf32>
      %cst_57 = arith.constant -1.000000e+00 : f32
      %cst_58 = arith.constant 1.000000e+00 : f32
      %158 = vector.broadcast %cst_57 : f32 to vector<8x8xf32>
      %159 = arith.maximumf %158, %157 : vector<8x8xf32>
      %160 = vector.broadcast %cst_58 : f32 to vector<8x8xf32>
      %161 = arith.minimumf %160, %159 : vector<8x8xf32>
      %cst_59 = arith.constant dense<0.000000e+00> : vector<8xf32>
      %162 = vector.multi_reduction <add>, %161, %cst_59 [1] : vector<8x8xf32> to vector<8xf32>
      %163 = vector.shape_cast %162 : vector<8xf32> to vector<8x1xf32>
      %cst_60 = arith.constant 1.000000e+00 : f32
      %164 = vector.broadcast %cst_60 : f32 to vector<8x1xf32>
      %165 = arith.cmpf ogt, %163, %164 : vector<8x1xf32>
      %166 = arith.select %165, %155, %151 : vector<8x1xi1>, vector<8x1xf32>
      %167 = arith.select %165, %152, %155 : vector<8x1xi1>, vector<8x1xf32>
      %c8_i32 = arith.constant 8 : i32
      %168 = arith.addf %166, %167 : vector<8x1xf32>
      %cst_61 = arith.constant 5.000000e-01 : f32
      %169 = vector.broadcast %cst_61 : f32 to vector<8x1xf32>
      %170 = arith.mulf %169, %168 : vector<8x1xf32>
      %171 = vector.broadcast %170 : vector<8x1xf32> to vector<8x8xf32>
      %172 = arith.subf %39, %171 : vector<8x8xf32>
      %cst_62 = arith.constant -1.000000e+00 : f32
      %cst_63 = arith.constant 1.000000e+00 : f32
      %173 = vector.broadcast %cst_62 : f32 to vector<8x8xf32>
      %174 = arith.maximumf %173, %172 : vector<8x8xf32>
      %175 = vector.broadcast %cst_63 : f32 to vector<8x8xf32>
      %176 = arith.minimumf %175, %174 : vector<8x8xf32>
      %cst_64 = arith.constant dense<0.000000e+00> : vector<8xf32>
      %177 = vector.multi_reduction <add>, %176, %cst_64 [1] : vector<8x8xf32> to vector<8xf32>
      %178 = vector.shape_cast %177 : vector<8xf32> to vector<8x1xf32>
      %cst_65 = arith.constant 1.000000e+00 : f32
      %179 = vector.broadcast %cst_65 : f32 to vector<8x1xf32>
      %180 = arith.cmpf ogt, %178, %179 : vector<8x1xf32>
      %181 = arith.select %180, %170, %166 : vector<8x1xi1>, vector<8x1xf32>
      %182 = arith.select %180, %167, %170 : vector<8x1xi1>, vector<8x1xf32>
      %c9_i32 = arith.constant 9 : i32
      %183 = arith.addf %181, %182 : vector<8x1xf32>
      %cst_66 = arith.constant 5.000000e-01 : f32
      %184 = vector.broadcast %cst_66 : f32 to vector<8x1xf32>
      %185 = arith.mulf %184, %183 : vector<8x1xf32>
      %186 = vector.broadcast %185 : vector<8x1xf32> to vector<8x8xf32>
      %187 = arith.subf %39, %186 : vector<8x8xf32>
      %cst_67 = arith.constant -1.000000e+00 : f32
      %cst_68 = arith.constant 1.000000e+00 : f32
      %188 = vector.broadcast %cst_67 : f32 to vector<8x8xf32>
      %189 = arith.maximumf %188, %187 : vector<8x8xf32>
      %190 = vector.broadcast %cst_68 : f32 to vector<8x8xf32>
      %191 = arith.minimumf %190, %189 : vector<8x8xf32>
      %cst_69 = arith.constant dense<0.000000e+00> : vector<8xf32>
      %192 = vector.multi_reduction <add>, %191, %cst_69 [1] : vector<8x8xf32> to vector<8xf32>
      %193 = vector.shape_cast %192 : vector<8xf32> to vector<8x1xf32>
      %cst_70 = arith.constant 1.000000e+00 : f32
      %194 = vector.broadcast %cst_70 : f32 to vector<8x1xf32>
      %195 = arith.cmpf ogt, %193, %194 : vector<8x1xf32>
      %196 = arith.select %195, %185, %181 : vector<8x1xi1>, vector<8x1xf32>
      %197 = arith.select %195, %182, %185 : vector<8x1xi1>, vector<8x1xf32>
      %c10_i32 = arith.constant 10 : i32
      %198 = arith.addf %196, %197 : vector<8x1xf32>
      %cst_71 = arith.constant 5.000000e-01 : f32
      %199 = vector.broadcast %cst_71 : f32 to vector<8x1xf32>
      %200 = arith.mulf %199, %198 : vector<8x1xf32>
      %201 = vector.broadcast %200 : vector<8x1xf32> to vector<8x8xf32>
      %202 = arith.subf %39, %201 : vector<8x8xf32>
      %cst_72 = arith.constant -1.000000e+00 : f32
      %cst_73 = arith.constant 1.000000e+00 : f32
      %203 = vector.broadcast %cst_72 : f32 to vector<8x8xf32>
      %204 = arith.maximumf %203, %202 : vector<8x8xf32>
      %205 = vector.broadcast %cst_73 : f32 to vector<8x8xf32>
      %206 = arith.minimumf %205, %204 : vector<8x8xf32>
      %cst_74 = arith.constant dense<0.000000e+00> : vector<8xf32>
      %207 = vector.multi_reduction <add>, %206, %cst_74 [1] : vector<8x8xf32> to vector<8xf32>
      %208 = vector.shape_cast %207 : vector<8xf32> to vector<8x1xf32>
      %cst_75 = arith.constant 1.000000e+00 : f32
      %209 = vector.broadcast %cst_75 : f32 to vector<8x1xf32>
      %210 = arith.cmpf ogt, %208, %209 : vector<8x1xf32>
      %211 = arith.select %210, %200, %196 : vector<8x1xi1>, vector<8x1xf32>
      %212 = arith.select %210, %197, %200 : vector<8x1xi1>, vector<8x1xf32>
      %c11_i32 = arith.constant 11 : i32
      %213 = arith.addf %211, %212 : vector<8x1xf32>
      %cst_76 = arith.constant 5.000000e-01 : f32
      %214 = vector.broadcast %cst_76 : f32 to vector<8x1xf32>
      %215 = arith.mulf %214, %213 : vector<8x1xf32>
      %216 = vector.broadcast %215 : vector<8x1xf32> to vector<8x8xf32>
      %217 = arith.subf %39, %216 : vector<8x8xf32>
      %cst_77 = arith.constant -1.000000e+00 : f32
      %cst_78 = arith.constant 1.000000e+00 : f32
      %218 = vector.broadcast %cst_77 : f32 to vector<8x8xf32>
      %219 = arith.maximumf %218, %217 : vector<8x8xf32>
      %220 = vector.broadcast %cst_78 : f32 to vector<8x8xf32>
      %221 = arith.minimumf %220, %219 : vector<8x8xf32>
      %cst_79 = arith.constant dense<0.000000e+00> : vector<8xf32>
      %222 = vector.multi_reduction <add>, %221, %cst_79 [1] : vector<8x8xf32> to vector<8xf32>
      %223 = vector.shape_cast %222 : vector<8xf32> to vector<8x1xf32>
      %cst_80 = arith.constant 1.000000e+00 : f32
      %224 = vector.broadcast %cst_80 : f32 to vector<8x1xf32>
      %225 = arith.cmpf ogt, %223, %224 : vector<8x1xf32>
      %226 = arith.select %225, %215, %211 : vector<8x1xi1>, vector<8x1xf32>
      %227 = arith.select %225, %212, %215 : vector<8x1xi1>, vector<8x1xf32>
      %c12_i32 = arith.constant 12 : i32
      %228 = arith.addf %226, %227 : vector<8x1xf32>
      %cst_81 = arith.constant 5.000000e-01 : f32
      %229 = vector.broadcast %cst_81 : f32 to vector<8x1xf32>
      %230 = arith.mulf %229, %228 : vector<8x1xf32>
      %231 = vector.broadcast %230 : vector<8x1xf32> to vector<8x8xf32>
      %232 = arith.subf %39, %231 : vector<8x8xf32>
      %cst_82 = arith.constant -1.000000e+00 : f32
      %cst_83 = arith.constant 1.000000e+00 : f32
      %233 = vector.broadcast %cst_82 : f32 to vector<8x8xf32>
      %234 = arith.maximumf %233, %232 : vector<8x8xf32>
      %235 = vector.broadcast %cst_83 : f32 to vector<8x8xf32>
      %236 = arith.minimumf %235, %234 : vector<8x8xf32>
      %cst_84 = arith.constant dense<0.000000e+00> : vector<8xf32>
      %237 = vector.multi_reduction <add>, %236, %cst_84 [1] : vector<8x8xf32> to vector<8xf32>
      %238 = vector.shape_cast %237 : vector<8xf32> to vector<8x1xf32>
      %cst_85 = arith.constant 1.000000e+00 : f32
      %239 = vector.broadcast %cst_85 : f32 to vector<8x1xf32>
      %240 = arith.cmpf ogt, %238, %239 : vector<8x1xf32>
      %241 = arith.select %240, %230, %226 : vector<8x1xi1>, vector<8x1xf32>
      %242 = arith.select %240, %227, %230 : vector<8x1xi1>, vector<8x1xf32>
      %c13_i32 = arith.constant 13 : i32
      %243 = arith.addf %241, %242 : vector<8x1xf32>
      %cst_86 = arith.constant 5.000000e-01 : f32
      %244 = vector.broadcast %cst_86 : f32 to vector<8x1xf32>
      %245 = arith.mulf %244, %243 : vector<8x1xf32>
      %246 = vector.broadcast %245 : vector<8x1xf32> to vector<8x8xf32>
      %247 = arith.subf %39, %246 : vector<8x8xf32>
      %cst_87 = arith.constant -1.000000e+00 : f32
      %cst_88 = arith.constant 1.000000e+00 : f32
      %248 = vector.broadcast %cst_87 : f32 to vector<8x8xf32>
      %249 = arith.maximumf %248, %247 : vector<8x8xf32>
      %250 = vector.broadcast %cst_88 : f32 to vector<8x8xf32>
      %251 = arith.minimumf %250, %249 : vector<8x8xf32>
      %cst_89 = arith.constant dense<0.000000e+00> : vector<8xf32>
      %252 = vector.multi_reduction <add>, %251, %cst_89 [1] : vector<8x8xf32> to vector<8xf32>
      %253 = vector.shape_cast %252 : vector<8xf32> to vector<8x1xf32>
      %cst_90 = arith.constant 1.000000e+00 : f32
      %254 = vector.broadcast %cst_90 : f32 to vector<8x1xf32>
      %255 = arith.cmpf ogt, %253, %254 : vector<8x1xf32>
      %256 = arith.select %255, %245, %241 : vector<8x1xi1>, vector<8x1xf32>
      %257 = arith.select %255, %242, %245 : vector<8x1xi1>, vector<8x1xf32>
      %c14_i32 = arith.constant 14 : i32
      %258 = arith.addf %256, %257 : vector<8x1xf32>
      %cst_91 = arith.constant 5.000000e-01 : f32
      %259 = vector.broadcast %cst_91 : f32 to vector<8x1xf32>
      %260 = arith.mulf %259, %258 : vector<8x1xf32>
      %261 = vector.broadcast %260 : vector<8x1xf32> to vector<8x8xf32>
      %262 = arith.subf %39, %261 : vector<8x8xf32>
      %cst_92 = arith.constant -1.000000e+00 : f32
      %cst_93 = arith.constant 1.000000e+00 : f32
      %263 = vector.broadcast %cst_92 : f32 to vector<8x8xf32>
      %264 = arith.maximumf %263, %262 : vector<8x8xf32>
      %265 = vector.broadcast %cst_93 : f32 to vector<8x8xf32>
      %266 = arith.minimumf %265, %264 : vector<8x8xf32>
      %cst_94 = arith.constant dense<0.000000e+00> : vector<8xf32>
      %267 = vector.multi_reduction <add>, %266, %cst_94 [1] : vector<8x8xf32> to vector<8xf32>
      %268 = vector.shape_cast %267 : vector<8xf32> to vector<8x1xf32>
      %cst_95 = arith.constant 1.000000e+00 : f32
      %269 = vector.broadcast %cst_95 : f32 to vector<8x1xf32>
      %270 = arith.cmpf ogt, %268, %269 : vector<8x1xf32>
      %271 = arith.select %270, %260, %256 : vector<8x1xi1>, vector<8x1xf32>
      %272 = arith.select %270, %257, %260 : vector<8x1xi1>, vector<8x1xf32>
      %c15_i32 = arith.constant 15 : i32
      %273 = arith.addf %271, %272 : vector<8x1xf32>
      %cst_96 = arith.constant 5.000000e-01 : f32
      %274 = vector.broadcast %cst_96 : f32 to vector<8x1xf32>
      %275 = arith.mulf %274, %273 : vector<8x1xf32>
      %276 = vector.broadcast %275 : vector<8x1xf32> to vector<8x8xf32>
      %277 = arith.subf %39, %276 : vector<8x8xf32>
      %cst_97 = arith.constant -1.000000e+00 : f32
      %cst_98 = arith.constant 1.000000e+00 : f32
      %278 = vector.broadcast %cst_97 : f32 to vector<8x8xf32>
      %279 = arith.maximumf %278, %277 : vector<8x8xf32>
      %280 = vector.broadcast %cst_98 : f32 to vector<8x8xf32>
      %281 = arith.minimumf %280, %279 : vector<8x8xf32>
      %cst_99 = arith.constant dense<0.000000e+00> : vector<8xf32>
      %282 = vector.multi_reduction <add>, %281, %cst_99 [1] : vector<8x8xf32> to vector<8xf32>
      %283 = vector.shape_cast %282 : vector<8xf32> to vector<8x1xf32>
      %cst_100 = arith.constant 1.000000e+00 : f32
      %284 = vector.broadcast %cst_100 : f32 to vector<8x1xf32>
      %285 = arith.cmpf ogt, %283, %284 : vector<8x1xf32>
      %286 = arith.select %285, %275, %271 : vector<8x1xi1>, vector<8x1xf32>
      %287 = arith.select %285, %272, %275 : vector<8x1xi1>, vector<8x1xf32>
      %c16_i32 = arith.constant 16 : i32
      %288 = arith.addf %286, %287 : vector<8x1xf32>
      %cst_101 = arith.constant 5.000000e-01 : f32
      %289 = vector.broadcast %cst_101 : f32 to vector<8x1xf32>
      %290 = arith.mulf %289, %288 : vector<8x1xf32>
      %291 = vector.broadcast %290 : vector<8x1xf32> to vector<8x8xf32>
      %292 = arith.subf %39, %291 : vector<8x8xf32>
      %cst_102 = arith.constant -1.000000e+00 : f32
      %cst_103 = arith.constant 1.000000e+00 : f32
      %293 = vector.broadcast %cst_102 : f32 to vector<8x8xf32>
      %294 = arith.maximumf %293, %292 : vector<8x8xf32>
      %295 = vector.broadcast %cst_103 : f32 to vector<8x8xf32>
      %296 = arith.minimumf %295, %294 : vector<8x8xf32>
      %cst_104 = arith.constant dense<0.000000e+00> : vector<8xf32>
      %297 = vector.multi_reduction <add>, %296, %cst_104 [1] : vector<8x8xf32> to vector<8xf32>
      %298 = vector.shape_cast %297 : vector<8xf32> to vector<8x1xf32>
      %cst_105 = arith.constant 1.000000e+00 : f32
      %299 = vector.broadcast %cst_105 : f32 to vector<8x1xf32>
      %300 = arith.cmpf ogt, %298, %299 : vector<8x1xf32>
      %301 = arith.select %300, %290, %286 : vector<8x1xi1>, vector<8x1xf32>
      %302 = arith.select %300, %287, %290 : vector<8x1xi1>, vector<8x1xf32>
      %c17_i32 = arith.constant 17 : i32
      %303 = arith.addf %301, %302 : vector<8x1xf32>
      %cst_106 = arith.constant 5.000000e-01 : f32
      %304 = vector.broadcast %cst_106 : f32 to vector<8x1xf32>
      %305 = arith.mulf %304, %303 : vector<8x1xf32>
      %306 = vector.broadcast %305 : vector<8x1xf32> to vector<8x8xf32>
      %307 = arith.subf %39, %306 : vector<8x8xf32>
      %cst_107 = arith.constant -1.000000e+00 : f32
      %cst_108 = arith.constant 1.000000e+00 : f32
      %308 = vector.broadcast %cst_107 : f32 to vector<8x8xf32>
      %309 = arith.maximumf %308, %307 : vector<8x8xf32>
      %310 = vector.broadcast %cst_108 : f32 to vector<8x8xf32>
      %311 = arith.minimumf %310, %309 : vector<8x8xf32>
      %cst_109 = arith.constant dense<0.000000e+00> : vector<8xf32>
      %312 = vector.multi_reduction <add>, %311, %cst_109 [1] : vector<8x8xf32> to vector<8xf32>
      %313 = vector.shape_cast %312 : vector<8xf32> to vector<8x1xf32>
      %cst_110 = arith.constant 1.000000e+00 : f32
      %314 = vector.broadcast %cst_110 : f32 to vector<8x1xf32>
      %315 = arith.cmpf ogt, %313, %314 : vector<8x1xf32>
      %316 = arith.select %315, %305, %301 : vector<8x1xi1>, vector<8x1xf32>
      %317 = arith.select %315, %302, %305 : vector<8x1xi1>, vector<8x1xf32>
      %c18_i32 = arith.constant 18 : i32
      %318 = arith.addf %316, %317 : vector<8x1xf32>
      %cst_111 = arith.constant 5.000000e-01 : f32
      %319 = vector.broadcast %cst_111 : f32 to vector<8x1xf32>
      %320 = arith.mulf %319, %318 : vector<8x1xf32>
      %321 = vector.broadcast %320 : vector<8x1xf32> to vector<8x8xf32>
      %322 = arith.subf %39, %321 : vector<8x8xf32>
      %cst_112 = arith.constant -1.000000e+00 : f32
      %cst_113 = arith.constant 1.000000e+00 : f32
      %323 = vector.broadcast %cst_112 : f32 to vector<8x8xf32>
      %324 = arith.maximumf %323, %322 : vector<8x8xf32>
      %325 = vector.broadcast %cst_113 : f32 to vector<8x8xf32>
      %326 = arith.minimumf %325, %324 : vector<8x8xf32>
      %cst_114 = arith.constant dense<0.000000e+00> : vector<8xf32>
      %327 = vector.multi_reduction <add>, %326, %cst_114 [1] : vector<8x8xf32> to vector<8xf32>
      %328 = vector.shape_cast %327 : vector<8xf32> to vector<8x1xf32>
      %cst_115 = arith.constant 1.000000e+00 : f32
      %329 = vector.broadcast %cst_115 : f32 to vector<8x1xf32>
      %330 = arith.cmpf ogt, %328, %329 : vector<8x1xf32>
      %331 = arith.select %330, %320, %316 : vector<8x1xi1>, vector<8x1xf32>
      %332 = arith.select %330, %317, %320 : vector<8x1xi1>, vector<8x1xf32>
      %c19_i32 = arith.constant 19 : i32
      %333 = arith.addf %331, %332 : vector<8x1xf32>
      %cst_116 = arith.constant 5.000000e-01 : f32
      %334 = vector.broadcast %cst_116 : f32 to vector<8x1xf32>
      %335 = arith.mulf %334, %333 : vector<8x1xf32>
      %336 = vector.broadcast %335 : vector<8x1xf32> to vector<8x8xf32>
      %337 = arith.subf %39, %336 : vector<8x8xf32>
      %cst_117 = arith.constant -1.000000e+00 : f32
      %cst_118 = arith.constant 1.000000e+00 : f32
      %338 = vector.broadcast %cst_117 : f32 to vector<8x8xf32>
      %339 = arith.maximumf %338, %337 : vector<8x8xf32>
      %340 = vector.broadcast %cst_118 : f32 to vector<8x8xf32>
      %341 = arith.minimumf %340, %339 : vector<8x8xf32>
      %cst_119 = arith.constant dense<0.000000e+00> : vector<8xf32>
      %342 = vector.multi_reduction <add>, %341, %cst_119 [1] : vector<8x8xf32> to vector<8xf32>
      %343 = vector.shape_cast %342 : vector<8xf32> to vector<8x1xf32>
      %cst_120 = arith.constant 1.000000e+00 : f32
      %344 = vector.broadcast %cst_120 : f32 to vector<8x1xf32>
      %345 = arith.cmpf ogt, %343, %344 : vector<8x1xf32>
      %346 = arith.select %345, %335, %331 : vector<8x1xi1>, vector<8x1xf32>
      %347 = arith.select %345, %332, %335 : vector<8x1xi1>, vector<8x1xf32>
      %c20_i32 = arith.constant 20 : i32
      %348 = arith.addf %346, %347 : vector<8x1xf32>
      %cst_121 = arith.constant 5.000000e-01 : f32
      %349 = vector.broadcast %cst_121 : f32 to vector<8x1xf32>
      %350 = arith.mulf %349, %348 : vector<8x1xf32>
      %351 = vector.broadcast %350 : vector<8x1xf32> to vector<8x8xf32>
      %352 = arith.subf %39, %351 : vector<8x8xf32>
      %cst_122 = arith.constant -1.000000e+00 : f32
      %cst_123 = arith.constant 1.000000e+00 : f32
      %353 = vector.broadcast %cst_122 : f32 to vector<8x8xf32>
      %354 = arith.maximumf %353, %352 : vector<8x8xf32>
      %355 = vector.broadcast %cst_123 : f32 to vector<8x8xf32>
      %356 = arith.minimumf %355, %354 : vector<8x8xf32>
      %cst_124 = arith.constant dense<0.000000e+00> : vector<8xf32>
      %357 = vector.multi_reduction <add>, %356, %cst_124 [1] : vector<8x8xf32> to vector<8xf32>
      %358 = vector.shape_cast %357 : vector<8xf32> to vector<8x1xf32>
      %cst_125 = arith.constant 1.000000e+00 : f32
      %359 = vector.broadcast %cst_125 : f32 to vector<8x1xf32>
      %360 = arith.cmpf ogt, %358, %359 : vector<8x1xf32>
      %361 = arith.select %360, %350, %346 : vector<8x1xi1>, vector<8x1xf32>
      %362 = arith.select %360, %347, %350 : vector<8x1xi1>, vector<8x1xf32>
      %c21_i32 = arith.constant 21 : i32
      %363 = arith.addf %361, %362 : vector<8x1xf32>
      %cst_126 = arith.constant 5.000000e-01 : f32
      %364 = vector.broadcast %cst_126 : f32 to vector<8x1xf32>
      %365 = arith.mulf %364, %363 : vector<8x1xf32>
      %366 = vector.broadcast %365 : vector<8x1xf32> to vector<8x8xf32>
      %367 = arith.subf %39, %366 : vector<8x8xf32>
      %cst_127 = arith.constant -1.000000e+00 : f32
      %cst_128 = arith.constant 1.000000e+00 : f32
      %368 = vector.broadcast %cst_127 : f32 to vector<8x8xf32>
      %369 = arith.maximumf %368, %367 : vector<8x8xf32>
      %370 = vector.broadcast %cst_128 : f32 to vector<8x8xf32>
      %371 = arith.minimumf %370, %369 : vector<8x8xf32>
      %cst_129 = arith.constant dense<0.000000e+00> : vector<8xf32>
      %372 = vector.multi_reduction <add>, %371, %cst_129 [1] : vector<8x8xf32> to vector<8xf32>
      %373 = vector.shape_cast %372 : vector<8xf32> to vector<8x1xf32>
      %cst_130 = arith.constant 1.000000e+00 : f32
      %374 = vector.broadcast %cst_130 : f32 to vector<8x1xf32>
      %375 = arith.cmpf ogt, %373, %374 : vector<8x1xf32>
      %376 = arith.select %375, %365, %361 : vector<8x1xi1>, vector<8x1xf32>
      %377 = arith.select %375, %362, %365 : vector<8x1xi1>, vector<8x1xf32>
      %c22_i32 = arith.constant 22 : i32
      %378 = arith.addf %376, %377 : vector<8x1xf32>
      %cst_131 = arith.constant 5.000000e-01 : f32
      %379 = vector.broadcast %cst_131 : f32 to vector<8x1xf32>
      %380 = arith.mulf %379, %378 : vector<8x1xf32>
      %381 = vector.broadcast %380 : vector<8x1xf32> to vector<8x8xf32>
      %382 = arith.subf %39, %381 : vector<8x8xf32>
      %cst_132 = arith.constant -1.000000e+00 : f32
      %cst_133 = arith.constant 1.000000e+00 : f32
      %383 = vector.broadcast %cst_132 : f32 to vector<8x8xf32>
      %384 = arith.maximumf %383, %382 : vector<8x8xf32>
      %385 = vector.broadcast %cst_133 : f32 to vector<8x8xf32>
      %386 = arith.minimumf %385, %384 : vector<8x8xf32>
      %cst_134 = arith.constant dense<0.000000e+00> : vector<8xf32>
      %387 = vector.multi_reduction <add>, %386, %cst_134 [1] : vector<8x8xf32> to vector<8xf32>
      %388 = vector.shape_cast %387 : vector<8xf32> to vector<8x1xf32>
      %cst_135 = arith.constant 1.000000e+00 : f32
      %389 = vector.broadcast %cst_135 : f32 to vector<8x1xf32>
      %390 = arith.cmpf ogt, %388, %389 : vector<8x1xf32>
      %391 = arith.select %390, %380, %376 : vector<8x1xi1>, vector<8x1xf32>
      %392 = arith.select %390, %377, %380 : vector<8x1xi1>, vector<8x1xf32>
      %c23_i32 = arith.constant 23 : i32
      %393 = arith.addf %391, %392 : vector<8x1xf32>
      %cst_136 = arith.constant 5.000000e-01 : f32
      %394 = vector.broadcast %cst_136 : f32 to vector<8x1xf32>
      %395 = arith.mulf %394, %393 : vector<8x1xf32>
      %396 = vector.broadcast %395 : vector<8x1xf32> to vector<8x8xf32>
      %397 = arith.subf %39, %396 : vector<8x8xf32>
      %cst_137 = arith.constant -1.000000e+00 : f32
      %cst_138 = arith.constant 1.000000e+00 : f32
      %398 = vector.broadcast %cst_137 : f32 to vector<8x8xf32>
      %399 = arith.maximumf %398, %397 : vector<8x8xf32>
      %400 = vector.broadcast %cst_138 : f32 to vector<8x8xf32>
      %401 = arith.minimumf %400, %399 : vector<8x8xf32>
      %cst_139 = arith.constant dense<0.000000e+00> : vector<8xf32>
      %402 = vector.multi_reduction <add>, %401, %cst_139 [1] : vector<8x8xf32> to vector<8xf32>
      %403 = vector.shape_cast %402 : vector<8xf32> to vector<8x1xf32>
      %cst_140 = arith.constant 1.000000e+00 : f32
      %404 = vector.broadcast %cst_140 : f32 to vector<8x1xf32>
      %405 = arith.cmpf ogt, %403, %404 : vector<8x1xf32>
      %406 = arith.select %405, %395, %391 : vector<8x1xi1>, vector<8x1xf32>
      %407 = arith.select %405, %392, %395 : vector<8x1xi1>, vector<8x1xf32>
      %c24_i32 = arith.constant 24 : i32
      %408 = arith.addf %406, %407 : vector<8x1xf32>
      %cst_141 = arith.constant 5.000000e-01 : f32
      %409 = vector.broadcast %cst_141 : f32 to vector<8x1xf32>
      %410 = arith.mulf %409, %408 : vector<8x1xf32>
      %411 = vector.broadcast %410 : vector<8x1xf32> to vector<8x8xf32>
      %412 = arith.subf %39, %411 : vector<8x8xf32>
      %cst_142 = arith.constant -1.000000e+00 : f32
      %cst_143 = arith.constant 1.000000e+00 : f32
      %413 = vector.broadcast %cst_142 : f32 to vector<8x8xf32>
      %414 = arith.maximumf %413, %412 : vector<8x8xf32>
      %415 = vector.broadcast %cst_143 : f32 to vector<8x8xf32>
      %416 = arith.minimumf %415, %414 : vector<8x8xf32>
      %cst_144 = arith.constant dense<0.000000e+00> : vector<8xf32>
      %417 = vector.multi_reduction <add>, %416, %cst_144 [1] : vector<8x8xf32> to vector<8xf32>
      %418 = vector.shape_cast %417 : vector<8xf32> to vector<8x1xf32>
      %cst_145 = arith.constant 1.000000e+00 : f32
      %419 = vector.broadcast %cst_145 : f32 to vector<8x1xf32>
      %420 = arith.cmpf ogt, %418, %419 : vector<8x1xf32>
      %421 = arith.select %420, %410, %406 : vector<8x1xi1>, vector<8x1xf32>
      %422 = arith.select %420, %407, %410 : vector<8x1xi1>, vector<8x1xf32>
      %c25_i32 = arith.constant 25 : i32
      %423 = arith.addf %421, %422 : vector<8x1xf32>
      %cst_146 = arith.constant 5.000000e-01 : f32
      %424 = vector.broadcast %cst_146 : f32 to vector<8x1xf32>
      %425 = arith.mulf %424, %423 : vector<8x1xf32>
      %426 = vector.broadcast %425 : vector<8x1xf32> to vector<8x8xf32>
      %427 = arith.subf %39, %426 : vector<8x8xf32>
      %cst_147 = arith.constant -1.000000e+00 : f32
      %cst_148 = arith.constant 1.000000e+00 : f32
      %428 = vector.broadcast %cst_147 : f32 to vector<8x8xf32>
      %429 = arith.maximumf %428, %427 : vector<8x8xf32>
      %430 = vector.broadcast %cst_148 : f32 to vector<8x8xf32>
      %431 = arith.minimumf %430, %429 : vector<8x8xf32>
      %cst_149 = arith.constant dense<0.000000e+00> : vector<8xf32>
      %432 = vector.multi_reduction <add>, %431, %cst_149 [1] : vector<8x8xf32> to vector<8xf32>
      %433 = vector.shape_cast %432 : vector<8xf32> to vector<8x1xf32>
      %cst_150 = arith.constant 1.000000e+00 : f32
      %434 = vector.broadcast %cst_150 : f32 to vector<8x1xf32>
      %435 = arith.cmpf ogt, %433, %434 : vector<8x1xf32>
      %436 = arith.select %435, %425, %421 : vector<8x1xi1>, vector<8x1xf32>
      %437 = arith.select %435, %422, %425 : vector<8x1xi1>, vector<8x1xf32>
      %c26_i32 = arith.constant 26 : i32
      %438 = arith.addf %436, %437 : vector<8x1xf32>
      %cst_151 = arith.constant 5.000000e-01 : f32
      %439 = vector.broadcast %cst_151 : f32 to vector<8x1xf32>
      %440 = arith.mulf %439, %438 : vector<8x1xf32>
      %441 = vector.broadcast %440 : vector<8x1xf32> to vector<8x8xf32>
      %442 = arith.subf %39, %441 : vector<8x8xf32>
      %cst_152 = arith.constant -1.000000e+00 : f32
      %cst_153 = arith.constant 1.000000e+00 : f32
      %443 = vector.broadcast %cst_152 : f32 to vector<8x8xf32>
      %444 = arith.maximumf %443, %442 : vector<8x8xf32>
      %445 = vector.broadcast %cst_153 : f32 to vector<8x8xf32>
      %446 = arith.minimumf %445, %444 : vector<8x8xf32>
      %cst_154 = arith.constant dense<0.000000e+00> : vector<8xf32>
      %447 = vector.multi_reduction <add>, %446, %cst_154 [1] : vector<8x8xf32> to vector<8xf32>
      %448 = vector.shape_cast %447 : vector<8xf32> to vector<8x1xf32>
      %cst_155 = arith.constant 1.000000e+00 : f32
      %449 = vector.broadcast %cst_155 : f32 to vector<8x1xf32>
      %450 = arith.cmpf ogt, %448, %449 : vector<8x1xf32>
      %451 = arith.select %450, %440, %436 : vector<8x1xi1>, vector<8x1xf32>
      %452 = arith.select %450, %437, %440 : vector<8x1xi1>, vector<8x1xf32>
      %c27_i32 = arith.constant 27 : i32
      %453 = arith.addf %451, %452 : vector<8x1xf32>
      %cst_156 = arith.constant 5.000000e-01 : f32
      %454 = vector.broadcast %cst_156 : f32 to vector<8x1xf32>
      %455 = arith.mulf %454, %453 : vector<8x1xf32>
      %456 = vector.broadcast %455 : vector<8x1xf32> to vector<8x8xf32>
      %457 = arith.subf %39, %456 : vector<8x8xf32>
      %cst_157 = arith.constant -1.000000e+00 : f32
      %cst_158 = arith.constant 1.000000e+00 : f32
      %458 = vector.broadcast %cst_157 : f32 to vector<8x8xf32>
      %459 = arith.maximumf %458, %457 : vector<8x8xf32>
      %460 = vector.broadcast %cst_158 : f32 to vector<8x8xf32>
      %461 = arith.minimumf %460, %459 : vector<8x8xf32>
      %cst_159 = arith.constant dense<0.000000e+00> : vector<8xf32>
      %462 = vector.multi_reduction <add>, %461, %cst_159 [1] : vector<8x8xf32> to vector<8xf32>
      %463 = vector.shape_cast %462 : vector<8xf32> to vector<8x1xf32>
      %cst_160 = arith.constant 1.000000e+00 : f32
      %464 = vector.broadcast %cst_160 : f32 to vector<8x1xf32>
      %465 = arith.cmpf ogt, %463, %464 : vector<8x1xf32>
      %466 = arith.select %465, %455, %451 : vector<8x1xi1>, vector<8x1xf32>
      %467 = arith.select %465, %452, %455 : vector<8x1xi1>, vector<8x1xf32>
      %468 = arith.addf %466, %467 : vector<8x1xf32>
      %cst_161 = arith.constant 5.000000e-01 : f32
      %469 = vector.broadcast %cst_161 : f32 to vector<8x1xf32>
      %470 = arith.mulf %469, %468 : vector<8x1xf32>
      %471 = vector.broadcast %470 : vector<8x1xf32> to vector<8x8xf32>
      %472 = arith.subf %39, %471 : vector<8x8xf32>
      %cst_162 = arith.constant -1.000000e+00 : f32
      %cst_163 = arith.constant 1.000000e+00 : f32
      %473 = vector.broadcast %cst_162 : f32 to vector<8x8xf32>
      %474 = arith.maximumf %473, %472 : vector<8x8xf32>
      %475 = vector.broadcast %cst_163 : f32 to vector<8x8xf32>
      %476 = arith.minimumf %475, %474 : vector<8x8xf32>
      scf.yield %476 : vector<8x8xf32>
    }
    %c0_12 = arith.constant 0 : index
    %c0_13 = arith.constant 0 : index
    %32 = vector.load %arg2[%c0_12, %c0_13] : memref<8x8xf32, #tpu.memory_space<vmem>>, vector<8x8xf32>
    tpu.vector_store %arg2[%c0_12, %c0_13], %31 {strides = array<i32>} : memref<8x8xf32, #tpu.memory_space<vmem>>, vector<8x8xf32>,
    return
  }
  func.func @transform_0(%arg0: i32) -> (i32, i32, i32) {
    %c0_i32 = arith.constant 0 : i32
    %c0_i32_0 = arith.constant 0 : i32
    %c0_i32_1 = arith.constant 0 : i32
    return %arg0, %c0_i32, %c0_i32_0 : i32, i32, i32
  }
  func.func @transform_1(%arg0: i32) -> (i32, i32) {
    %c0_i32 = arith.constant 0 : i32
    %c0_i32_0 = arith.constant 0 : i32
    return %arg0, %c0_i32 : i32, i32
  }
}

</mosaic_0001>

<llo_original>
// kernel: dense_net_min_var.2
$region0: #{dense_net_min_var.2}
  #allocation0 [shape = 'u32[]', space=smem, size = 0x4, offset = 0x4, fixed_abs, tag = 'smem constant byte address 0x4 - core index']
  #allocation1 [shape = 'u32[72,128]{1,0:T(1,128)}', space=vmem, size = 0x9000, scoped, tag = 'internal scratch']
  %s0 = inlined_call_operand.vmem [shape: f32[16,128], index: 0, kind: input, shape index: {}]
  %s1 = inlined_call_operand.vmem [shape: f32[1,128], index: 1, kind: input, shape index: {}]
  %s2 = inlined_call_operand.vmem [shape: f32[1,128], index: 2, kind: input, shape index: {}]
  %s3 = inlined_call_operand.vmem [shape: f32[1,128], index: 3, kind: input, shape index: {}]
  %s4 = inlined_call_operand.vmem [shape: f32[1,128], index: 4, kind: input, shape index: {}]
  %s5 = inlined_call_operand.vmem [shape: f32[128,1200], index: 5, kind: input, shape index: {}]
  %s6 = inlined_call_operand.vmem [shape: f32[1,1200], index: 6, kind: input, shape index: {}]
  %s7 = inlined_call_operand.vmem [shape: f32[16,1200], index: 7, kind: output, shape index: {}]
  %s8 = sld [smem:[#allocation0]]
  $region61: #{dense_net_min_var.2} parent=0
    _
  %s10 = ssub.s32 1, %s8
  %s11 = scalar_select 0, %s10, %s8
  loop: start=0, step=1, limit=4
  $region2: #{dense_net_min_var.2} parent=0 // loop_pre_header
    _
  $region3: #{dense_net_min_var.2} parent=0 // loop_header
    %s13 = sphi 0, %s17
    %p14 = scmp.ge.s32.totalorder %s13, 4
    %s23 = sphi 0, %s25
    %s26 = sphi 0, %s23
    %s27 = sphi 0, %s26
    %s43 = sphi 0, %s27
    %s47 = sphi 0, %s47
    %s49 = sphi 0, %s47
    %s50 = sphi 0, %s49
    %s64 = sphi 0, %s50
    %s68 = sphi 0, %s68
    %s70 = sphi 0, %s68
    %s71 = sphi 0, %s70
    %s85 = sphi 0, %s71
    %s89 = sphi 0, %s89
    %s91 = sphi 0, %s89
    %s92 = sphi 0, %s91
    %s106 = sphi 0, %s92
    %s110 = sphi 0, %s110
    %s112 = sphi 0, %s110
    %s113 = sphi 0, %s112
    %s127 = sphi 0, %s113
    %s131 = sphi 0, %s131
    %s133 = sphi 0, %s131
    %s134 = sphi 0, %s133
    %s148 = sphi 0, %s134
    %s152 = sphi 0, %s152
    %s154 = sphi 0, %s152
    %s155 = sphi 0, %s154
    %s169 = sphi 0, %s155
    %s175 = sphi 0, %s177
    %s178 = sphi 0, %s175
    %s179 = sphi 0, %s178
    %s195 = sphi 0, %s179
  $region4: #{dense_net_min_var.2} parent=0 // loop_header_branch
    %16 = sbr.rel (%p14) target = $region8
  $region5: #{dense_net_min_var.2} parent=0 // loop_body
    %s18 = ssub.s32 %s13, 1
    %s19 = ssub.s32 %s13, 2
    %s20 = sadd.s32 %s13, 1
    %s21 = ssub.s32 %s13, %s20
    %p22 = scmp.eq.s32.totalorder %s21, 0
    %s24 = sadd.s32 %s23, 1
    %s25 = scalar_select %p22, %s23, %s24
    %p28 = pneg %p22
    %p29 = scmp.eq.s32.totalorder %s13, 1
    %p30 = por %p28, %p29
    %p31 = scmp.ne.s32.totalorder %s23, %s26
    %p32 = scmp.eq.s32.totalorder %s13, 0
    %p33 = por %p31, %p32
    %p34 = scmp.ne.s32.totalorder %s23, %s26
    %p35 = scmp.eq.s32.totalorder %s18, 1
    %p36 = por %p34, %p35
    %p37 = scmp.ne.s32.totalorder %s26, %s27
    %p38 = scmp.eq.s32.totalorder %s18, 0
    %p39 = por %p37, %p38
    %p40 = scmp.ne.s32.totalorder %s26, %s27
    %p41 = scmp.eq.s32.totalorder %s19, 1
    %p42 = por %p40, %p41
    %p44 = scmp.ne.s32.totalorder %s27, %s43
    %p45 = scmp.eq.s32.totalorder %s19, 0
    %p46 = por %p44, %p45
    %s48 = sadd.s32 %s47, 1
    %p51 = scmp.eq.s32.totalorder %s13, 1
    %p52 = scmp.ne.s32.totalorder %s47, %s49
    %p53 = scmp.eq.s32.totalorder %s13, 0
    %p54 = por %p52, %p53
    %p55 = scmp.ne.s32.totalorder %s47, %s49
    %p56 = scmp.eq.s32.totalorder %s18, 1
    %p57 = por %p55, %p56
    %p58 = scmp.ne.s32.totalorder %s49, %s50
    %p59 = scmp.eq.s32.totalorder %s18, 0
    %p60 = por %p58, %p59
    %p61 = scmp.ne.s32.totalorder %s49, %s50
    %p62 = scmp.eq.s32.totalorder %s19, 1
    %p63 = por %p61, %p62
    %p65 = scmp.ne.s32.totalorder %s50, %s64
    %p66 = scmp.eq.s32.totalorder %s19, 0
    %p67 = por %p65, %p66
    %s69 = sadd.s32 %s68, 1
    %p72 = scmp.eq.s32.totalorder %s13, 1
    %p73 = scmp.ne.s32.totalorder %s68, %s70
    %p74 = scmp.eq.s32.totalorder %s13, 0
    %p75 = por %p73, %p74
    %p76 = scmp.ne.s32.totalorder %s68, %s70
    %p77 = scmp.eq.s32.totalorder %s18, 1
    %p78 = por %p76, %p77
    %p79 = scmp.ne.s32.totalorder %s70, %s71
    %p80 = scmp.eq.s32.totalorder %s18, 0
    %p81 = por %p79, %p80
    %p82 = scmp.ne.s32.totalorder %s70, %s71
    %p83 = scmp.eq.s32.totalorder %s19, 1
    %p84 = por %p82, %p83
    %p86 = scmp.ne.s32.totalorder %s71, %s85
    %p87 = scmp.eq.s32.totalorder %s19, 0
    %p88 = por %p86, %p87
    %s90 = sadd.s32 %s89, 1
    %p93 = scmp.eq.s32.totalorder %s13, 1
    %p94 = scmp.ne.s32.totalorder %s89, %s91
    %p95 = scmp.eq.s32.totalorder %s13, 0
    %p96 = por %p94, %p95
    %p97 = scmp.ne.s32.totalorder %s89, %s91
    %p98 = scmp.eq.s32.totalorder %s18, 1
    %p99 = por %p97, %p98
    %p100 = scmp.ne.s32.totalorder %s91, %s92
    %p101 = scmp.eq.s32.totalorder %s18, 0
    %p102 = por %p100, %p101
    %p103 = scmp.ne.s32.totalorder %s91, %s92
    %p104 = scmp.eq.s32.totalorder %s19, 1
    %p105 = por %p103, %p104
    %p107 = scmp.ne.s32.totalorder %s92, %s106
    %p108 = scmp.eq.s32.totalorder %s19, 0
    %p109 = por %p107, %p108
    %s111 = sadd.s32 %s110, 1
    %p114 = scmp.eq.s32.totalorder %s13, 1
    %p115 = scmp.ne.s32.totalorder %s110, %s112
    %p116 = scmp.eq.s32.totalorder %s13, 0
    %p117 = por %p115, %p116
    %p118 = scmp.ne.s32.totalorder %s110, %s112
    %p119 = scmp.eq.s32.totalorder %s18, 1
    %p120 = por %p118, %p119
    %p121 = scmp.ne.s32.totalorder %s112, %s113
    %p122 = scmp.eq.s32.totalorder %s18, 0
    %p123 = por %p121, %p122
    %p124 = scmp.ne.s32.totalorder %s112, %s113
    %p125 = scmp.eq.s32.totalorder %s19, 1
    %p126 = por %p124, %p125
    %p128 = scmp.ne.s32.totalorder %s113, %s127
    %p129 = scmp.eq.s32.totalorder %s19, 0
    %p130 = por %p128, %p129
    %s132 = sadd.s32 %s131, 1
    %p135 = scmp.eq.s32.totalorder %s13, 1
    %p136 = scmp.ne.s32.totalorder %s131, %s133
    %p137 = scmp.eq.s32.totalorder %s13, 0
    %p138 = por %p136, %p137
    %p139 = scmp.ne.s32.totalorder %s131, %s133
    %p140 = scmp.eq.s32.totalorder %s18, 1
    %p141 = por %p139, %p140
    %p142 = scmp.ne.s32.totalorder %s133, %s134
    %p143 = scmp.eq.s32.totalorder %s18, 0
    %p144 = por %p142, %p143
    %p145 = scmp.ne.s32.totalorder %s133, %s134
    %p146 = scmp.eq.s32.totalorder %s19, 1
    %p147 = por %p145, %p146
    %p149 = scmp.ne.s32.totalorder %s134, %s148
    %p150 = scmp.eq.s32.totalorder %s19, 0
    %p151 = por %p149, %p150
    %s153 = sadd.s32 %s152, 1
    %p156 = scmp.eq.s32.totalorder %s13, 1
    %p157 = scmp.ne.s32.totalorder %s152, %s154
    %p158 = scmp.eq.s32.totalorder %s13, 0
    %p159 = por %p157, %p158
    %p160 = scmp.ne.s32.totalorder %s152, %s154
    %p161 = scmp.eq.s32.totalorder %s18, 1
    %p162 = por %p160, %p161
    %p163 = scmp.ne.s32.totalorder %s154, %s155
    %p164 = scmp.eq.s32.totalorder %s18, 0
    %p165 = por %p163, %p164
    %p166 = scmp.ne.s32.totalorder %s154, %s155
    %p167 = scmp.eq.s32.totalorder %s19, 1
    %p168 = por %p166, %p167
    %p170 = scmp.ne.s32.totalorder %s155, %s169
    %p171 = scmp.eq.s32.totalorder %s19, 0
    %p172 = por %p170, %p171
    %s173 = ssub.s32 %s13, %s20
    %p174 = scmp.eq.s32.totalorder %s173, 0
    %s176 = sadd.s32 %s175, 1
    %s177 = scalar_select %p174, %s175, %s176
    %p180 = pneg %p174
    %p181 = scmp.eq.s32.totalorder %s13, 1
    %p182 = por %p180, %p181
    %p183 = scmp.ne.s32.totalorder %s175, %s178
    %p184 = scmp.eq.s32.totalorder %s13, 0
    %p185 = por %p183, %p184
    %p186 = scmp.ne.s32.totalorder %s175, %s178
    %p187 = scmp.eq.s32.totalorder %s18, 1
    %p188 = por %p186, %p187
    %p189 = scmp.ne.s32.totalorder %s178, %s179
    %p190 = scmp.eq.s32.totalorder %s18, 0
    %p191 = por %p189, %p190
    %p192 = scmp.ne.s32.totalorder %s178, %s179
    %p193 = scmp.eq.s32.totalorder %s19, 1
    %p194 = por %p192, %p193
    %p196 = scmp.ne.s32.totalorder %s179, %s195
    %p197 = scmp.eq.s32.totalorder %s19, 0
    %p198 = por %p196, %p197
    %p199 = scmp.le.s32.totalorder 1, %s13
    %p200 = scmp.lt.s32.totalorder %s13, 3
    %p201 = pnand %p199, %p200
    %p202 = pneg %p201
    // Predicated region
    $region9: #{dense_net_min_var.2} parent=5 // pred_check
      _
    $region10: #{dense_net_min_var.2} parent=5 // pred_check_branch
      %204 = sbr.rel (%p201) target = $region12
    $region11: #{dense_net_min_var.2} parent=5 // pred_region
      %s205 = ssub.s32 %s13, 1
      // Predicated region
      $region13: #{dense_net_min_var.2} parent=11 // pred_check
        %p206 = pneg %p60
      $region14: #{dense_net_min_var.2} parent=11 // pred_check_branch
        %208 = sbr.rel (%p206) target = $region16
      $region15: #{dense_net_min_var.2} parent=11 // pred_region
        _
      $region16: #{dense_net_min_var.2} parent=11 // pred_fallthru
        _
      // Predicated region
      $region17: #{dense_net_min_var.2} parent=11 // pred_check
        %p209 = pneg %p81
      $region18: #{dense_net_min_var.2} parent=11 // pred_check_branch
        %211 = sbr.rel (%p209) target = $region20
      $region19: #{dense_net_min_var.2} parent=11 // pred_region
        _
      $region20: #{dense_net_min_var.2} parent=11 // pred_fallthru
        _
      // Predicated region
      $region21: #{dense_net_min_var.2} parent=11 // pred_check
        %p212 = pneg %p102
      $region22: #{dense_net_min_var.2} parent=11 // pred_check_branch
        %214 = sbr.rel (%p212) target = $region24
      $region23: #{dense_net_min_var.2} parent=11 // pred_region
        _
      $region24: #{dense_net_min_var.2} parent=11 // pred_fallthru
        _
      // Predicated region
      $region25: #{dense_net_min_var.2} parent=11 // pred_check
        %p215 = pneg %p123
      $region26: #{dense_net_min_var.2} parent=11 // pred_check_branch
        %217 = sbr.rel (%p215) target = $region28
      $region27: #{dense_net_min_var.2} parent=11 // pred_region
        _
      $region28: #{dense_net_min_var.2} parent=11 // pred_fallthru
        _
      // Predicated region
      $region29: #{dense_net_min_var.2} parent=11 // pred_check
        %p218 = pneg %p144
      $region30: #{dense_net_min_var.2} parent=11 // pred_check_branch
        %220 = sbr.rel (%p218) target = $region32
      $region31: #{dense_net_min_var.2} parent=11 // pred_region
        _
      $region32: #{dense_net_min_var.2} parent=11 // pred_fallthru
        _
      // Predicated region
      $region33: #{dense_net_min_var.2} parent=11 // pred_check
        %p221 = pneg %p165
      $region34: #{dense_net_min_var.2} parent=11 // pred_check_branch
        %223 = sbr.rel (%p221) target = $region36
      $region35: #{dense_net_min_var.2} parent=11 // pred_region
        _
      $region36: #{dense_net_min_var.2} parent=11 // pred_fallthru
        _
    $region12: #{dense_net_min_var.2} parent=5 // pred_fallthru
      _
    %p224 = scmp.lt.s32.totalorder %s13, 2
    // Predicated region
    $region37: #{dense_net_min_var.2} parent=5 // pred_check
      %p225 = pneg %p224
    $region38: #{dense_net_min_var.2} parent=5 // pred_check_branch
      %227 = sbr.rel (%p225) target = $region40
    $region39: #{dense_net_min_var.2} parent=5 // pred_region
      // Predicated region
      $region41: #{dense_net_min_var.2} parent=39 // pred_check
        %p228 = pneg %p33
      $region42: #{dense_net_min_var.2} parent=39 // pred_check_branch
        %230 = sbr.rel (%p228) target = $region44
      $region43: #{dense_net_min_var.2} parent=39 // pred_region
        %p231 = scmp.lt.s32.totalorder %s13, 1
        %s232 = scalar_select %p231, %s13, 1
        %s233 = smul.addr %s232, 8
        %s234 = scalar_lea.vmem %s0, %s233
      $region44: #{dense_net_min_var.2} parent=39 // pred_fallthru
        _
    $region40: #{dense_net_min_var.2} parent=5 // pred_fallthru
      _
    %p235 = scmp.le.s32.totalorder 1, %s13
    %p236 = scmp.lt.s32.totalorder %s13, 3
    %p237 = pnand %p235, %p236
    %p238 = pneg %p237
    // Predicated region
    $region45: #{dense_net_min_var.2} parent=5 // pred_check
      _
    $region46: #{dense_net_min_var.2} parent=5 // pred_check_branch
      %240 = sbr.rel (%p237) target = $region48
    $region47: #{dense_net_min_var.2} parent=5 // pred_region
      %s241 = ssub.s32 %s13, 1
      %p242 = scmp.lt.s32.totalorder %s18, 1
      %s243 = scalar_select %p242, %s18, 1
      %s244 = smul.addr %s243, 8
      %s245 = scalar_lea.vmem %s0, %s244
      %p246 = pneg %p39
      %p247 = pneg %p36
      %p248 = pneg %p60
      %p249 = pneg %p57
      %p250 = pneg %p81
      %p251 = pneg %p78
      %p252 = pneg %p102
      %p253 = pneg %p99
      %p254 = pneg %p123
      %p255 = pneg %p120
      %p256 = pneg %p144
      %p257 = pneg %p141
      %p258 = pneg %p165
      %p259 = pneg %p162
      %p260 = pneg %p191
      %p261 = pneg %p188
      %p262 = scmp.lt.s32.totalorder %s18, 1
      %s263 = scalar_select %p262, %s18, 1
      %s264 = smul.addr %s263, 10
      %s265 = smul.addr %s264, 8
      %s266 = scalar_lea.vmem %s7, %s265
      %p267 = scmp.lt.s32.totalorder %s18, 1
      %s268 = scalar_select %p267, %s18, 1
      %s269 = smul.addr %s268, 8
      %s270 = scalar_lea.vmem %s0, %s269
      %p271 = scmp.lt.s32.totalorder %s18, 1
      %s272 = scalar_select %p271, %s18, 1
      %s273 = smul.addr %s272, 10
      %s274 = smul.addr %s273, 8
      %s275 = scalar_lea.vmem %s7, %s274
      %v276 = vld [vmem:[%s270] sm:$0xff]
      %v277 = vld [vmem:[%s2] sm:$0x1]
      %v278 = vadd.f32 %v277, 1e-05
      %v279 = vrsqrt.pop %v278
      %v280 = vmul.f32 %v279, %v278
      %v281 = vmul.f32 %v280, %v279
      %v282 = vmul.f32 0.5, %v281
      %v283 = vsub.f32 1.5, %v282
      %v284 = vmul.f32 %v279, %v283
      %vm285 = vweird.f32 %v278
      %vm286 = vweird.f32 %v279
      %vm287 = vmor %vm285, %vm286
      %v288 = vsel %vm287, %v279, %v284
      %v289 = vld [vmem:[%s1] sm:$0x1]
      %v291 = vperm.slane %v289, 0
      %v293 = vsub.f32 %v276, %v291
      %v294 = vld [vmem:[%s3] sm:$0x1]
      %v295 = vmul.f32 %v294, %v288
      %v297 = vperm.slane %v295, 0
      %v299 = vmul.f32 %v293, %v297
      %v300 = vld [vmem:[%s4] sm:$0x1]
      %v302 = vperm.slane %v300, 0
      %v304 = vadd.f32 %v299, %v302
      %v305 = vld [vmem:[%s5] sm:$0xff]
      %v306 = vld [vmem:[%s5 + $0x8] sm:$0xff]
      %v307 = vld [vmem:[%s5 + $0x10] sm:$0xff]
      %v308 = vld [vmem:[%s5 + $0x18] sm:$0xff]
      %v309 = vld [vmem:[%s5 + $0x20] sm:$0xff]
      %v310 = vld [vmem:[%s5 + $0x28] sm:$0xff]
      %v311 = vld [vmem:[%s5 + $0x30] sm:$0xff]
      %v312 = vld [vmem:[%s5 + $0x38] sm:$0xff]
      %v313 = vld [vmem:[%s5 + $0x40] sm:$0xff]
      %v314 = vld [vmem:[%s5 + $0x48] sm:$0xff]
      %v315 = vld [vmem:[%s5 + $0x50] sm:$0xff]
      %v316 = vld [vmem:[%s5 + $0x58] sm:$0xff]
      %v317 = vld [vmem:[%s5 + $0x60] sm:$0xff]
      %v318 = vld [vmem:[%s5 + $0x68] sm:$0xff]
      %v319 = vld [vmem:[%s5 + $0x70] sm:$0xff]
      %v320 = vld [vmem:[%s5 + $0x78] sm:$0xff]
      %v321 = vld [vmem:[%s5 + $0x80] sm:$0xff]
      %v322 = vld [vmem:[%s5 + $0x88] sm:$0xff]
      %v323 = vld [vmem:[%s5 + $0x90] sm:$0xff]
      %v324 = vld [vmem:[%s5 + $0x98] sm:$0xff]
      %v325 = vld [vmem:[%s5 + $0xa0] sm:$0xff]
      %v326 = vld [vmem:[%s5 + $0xa8] sm:$0xff]
      %v327 = vld [vmem:[%s5 + $0xb0] sm:$0xff]
      %v328 = vld [vmem:[%s5 + $0xb8] sm:$0xff]
      %v329 = vld [vmem:[%s5 + $0xc0] sm:$0xff]
      %v330 = vld [vmem:[%s5 + $0xc8] sm:$0xff]
      %v331 = vld [vmem:[%s5 + $0xd0] sm:$0xff]
      %v332 = vld [vmem:[%s5 + $0xd8] sm:$0xff]
      %v333 = vld [vmem:[%s5 + $0xe0] sm:$0xff]
      %v334 = vld [vmem:[%s5 + $0xe8] sm:$0xff]
      %v335 = vld [vmem:[%s5 + $0xf0] sm:$0xff]
      %v336 = vld [vmem:[%s5 + $0xf8] sm:$0xff]
      %v337 = vld [vmem:[%s5 + $0x100] sm:$0xff]
      %v338 = vld [vmem:[%s5 + $0x108] sm:$0xff]
      %v339 = vld [vmem:[%s5 + $0x110] sm:$0xff]
      %v340 = vld [vmem:[%s5 + $0x118] sm:$0xff]
      %v341 = vld [vmem:[%s5 + $0x120] sm:$0xff]
      %v342 = vld [vmem:[%s5 + $0x128] sm:$0xff]
      %v343 = vld [vmem:[%s5 + $0x130] sm:$0xff]
      %v344 = vld [vmem:[%s5 + $0x138] sm:$0xff]
      %v345 = vld [vmem:[%s5 + $0x140] sm:$0xff]
      %v346 = vld [vmem:[%s5 + $0x148] sm:$0xff]
      %v347 = vld [vmem:[%s5 + $0x150] sm:$0xff]
      %v348 = vld [vmem:[%s5 + $0x158] sm:$0xff]
      %v349 = vld [vmem:[%s5 + $0x160] sm:$0xff]
      %v350 = vld [vmem:[%s5 + $0x168] sm:$0xff]
      %v351 = vld [vmem:[%s5 + $0x170] sm:$0xff]
      %v352 = vld [vmem:[%s5 + $0x178] sm:$0xff]
      %v353 = vld [vmem:[%s5 + $0x180] sm:$0xff]
      %v354 = vld [vmem:[%s5 + $0x188] sm:$0xff]
      %v355 = vld [vmem:[%s5 + $0x190] sm:$0xff]
      %v356 = vld [vmem:[%s5 + $0x198] sm:$0xff]
      %v357 = vld [vmem:[%s5 + $0x1a0] sm:$0xff]
      %v358 = vld [vmem:[%s5 + $0x1a8] sm:$0xff]
      %v359 = vld [vmem:[%s5 + $0x1b0] sm:$0xff]
      %v360 = vld [vmem:[%s5 + $0x1b8] sm:$0xff]
      %v361 = vld [vmem:[%s5 + $0x1c0] sm:$0xff]
      %v362 = vld [vmem:[%s5 + $0x1c8] sm:$0xff]
      %v363 = vld [vmem:[%s5 + $0x1d0] sm:$0xff]
      %v364 = vld [vmem:[%s5 + $0x1d8] sm:$0xff]
      %v365 = vld [vmem:[%s5 + $0x1e0] sm:$0xff]
      %v366 = vld [vmem:[%s5 + $0x1e8] sm:$0xff]
      %v367 = vld [vmem:[%s5 + $0x1f0] sm:$0xff]
      %v368 = vld [vmem:[%s5 + $0x1f8] sm:$0xff]
      %v369 = vld [vmem:[%s5 + $0x200] sm:$0xff]
      %v370 = vld [vmem:[%s5 + $0x208] sm:$0xff]
      %v371 = vld [vmem:[%s5 + $0x210] sm:$0xff]
      %v372 = vld [vmem:[%s5 + $0x218] sm:$0xff]
      %v373 = vld [vmem:[%s5 + $0x220] sm:$0xff]
      %v374 = vld [vmem:[%s5 + $0x228] sm:$0xff]
      %v375 = vld [vmem:[%s5 + $0x230] sm:$0xff]
      %v376 = vld [vmem:[%s5 + $0x238] sm:$0xff]
      %v377 = vld [vmem:[%s5 + $0x240] sm:$0xff]
      %v378 = vld [vmem:[%s5 + $0x248] sm:$0xff]
      %v379 = vld [vmem:[%s5 + $0x250] sm:$0xff]
      %v380 = vld [vmem:[%s5 + $0x258] sm:$0xff]
      %v381 = vld [vmem:[%s5 + $0x260] sm:$0xff]
      %v382 = vld [vmem:[%s5 + $0x268] sm:$0xff]
      %v383 = vld [vmem:[%s5 + $0x270] sm:$0xff]
      %v384 = vld [vmem:[%s5 + $0x278] sm:$0xff]
      %v385 = vld [vmem:[%s5 + $0x280] sm:$0xff]
      %v386 = vld [vmem:[%s5 + $0x288] sm:$0xff]
      %v387 = vld [vmem:[%s5 + $0x290] sm:$0xff]
      %v388 = vld [vmem:[%s5 + $0x298] sm:$0xff]
      %v389 = vld [vmem:[%s5 + $0x2a0] sm:$0xff]
      %v390 = vld [vmem:[%s5 + $0x2a8] sm:$0xff]
      %v391 = vld [vmem:[%s5 + $0x2b0] sm:$0xff]
      %v392 = vld [vmem:[%s5 + $0x2b8] sm:$0xff]
      %v393 = vld [vmem:[%s5 + $0x2c0] sm:$0xff]
      %v394 = vld [vmem:[%s5 + $0x2c8] sm:$0xff]
      %v395 = vld [vmem:[%s5 + $0x2d0] sm:$0xff]
      %v396 = vld [vmem:[%s5 + $0x2d8] sm:$0xff]
      %v397 = vld [vmem:[%s5 + $0x2e0] sm:$0xff]
      %v398 = vld [vmem:[%s5 + $0x2e8] sm:$0xff]
      %v399 = vld [vmem:[%s5 + $0x2f0] sm:$0xff]
      %v400 = vld [vmem:[%s5 + $0x2f8] sm:$0xff]
      %v401 = vld [vmem:[%s5 + $0x300] sm:$0xff]
      %v402 = vld [vmem:[%s5 + $0x308] sm:$0xff]
      %v403 = vld [vmem:[%s5 + $0x310] sm:$0xff]
      %v404 = vld [vmem:[%s5 + $0x318] sm:$0xff]
      %v405 = vld [vmem:[%s5 + $0x320] sm:$0xff]
      %v406 = vld [vmem:[%s5 + $0x328] sm:$0xff]
      %v407 = vld [vmem:[%s5 + $0x330] sm:$0xff]
      %v408 = vld [vmem:[%s5 + $0x338] sm:$0xff]
      %v409 = vld [vmem:[%s5 + $0x340] sm:$0xff]
      %v410 = vld [vmem:[%s5 + $0x348] sm:$0xff]
      %v411 = vld [vmem:[%s5 + $0x350] sm:$0xff]
      %v412 = vld [vmem:[%s5 + $0x358] sm:$0xff]
      %v413 = vld [vmem:[%s5 + $0x360] sm:$0xff]
      %v414 = vld [vmem:[%s5 + $0x368] sm:$0xff]
      %v415 = vld [vmem:[%s5 + $0x370] sm:$0xff]
      %v416 = vld [vmem:[%s5 + $0x378] sm:$0xff]
      %v417 = vld [vmem:[%s5 + $0x380] sm:$0xff]
      %v418 = vld [vmem:[%s5 + $0x388] sm:$0xff]
      %v419 = vld [vmem:[%s5 + $0x390] sm:$0xff]
      %v420 = vld [vmem:[%s5 + $0x398] sm:$0xff]
      %v421 = vld [vmem:[%s5 + $0x3a0] sm:$0xff]
      %v422 = vld [vmem:[%s5 + $0x3a8] sm:$0xff]
      %v423 = vld [vmem:[%s5 + $0x3b0] sm:$0xff]
      %v424 = vld [vmem:[%s5 + $0x3b8] sm:$0xff]
      %v425 = vld [vmem:[%s5 + $0x3c0] sm:$0xff]
      %v426 = vld [vmem:[%s5 + $0x3c8] sm:$0xff]
      %v427 = vld [vmem:[%s5 + $0x3d0] sm:$0xff]
      %v428 = vld [vmem:[%s5 + $0x3d8] sm:$0xff]
      %v429 = vld [vmem:[%s5 + $0x3e0] sm:$0xff]
      %v430 = vld [vmem:[%s5 + $0x3e8] sm:$0xff]
      %v431 = vld [vmem:[%s5 + $0x3f0] sm:$0xff]
      %v432 = vld [vmem:[%s5 + $0x3f8] sm:$0xff]
      %v433 = vld [vmem:[%s5 + $0x400] sm:$0xff]
      %v434 = vld [vmem:[%s5 + $0x408] sm:$0xff]
      %v435 = vld [vmem:[%s5 + $0x410] sm:$0xff]
      %v436 = vld [vmem:[%s5 + $0x418] sm:$0xff]
      %v437 = vld [vmem:[%s5 + $0x420] sm:$0xff]
      %v438 = vld [vmem:[%s5 + $0x428] sm:$0xff]
      %v439 = vld [vmem:[%s5 + $0x430] sm:$0xff]
      %v440 = vld [vmem:[%s5 + $0x438] sm:$0xff]
      %v441 = vld [vmem:[%s5 + $0x440] sm:$0xff]
      %v442 = vld [vmem:[%s5 + $0x448] sm:$0xff]
      %v443 = vld [vmem:[%s5 + $0x450] sm:$0xff]
      %v444 = vld [vmem:[%s5 + $0x458] sm:$0xff]
      %v445 = vld [vmem:[%s5 + $0x460] sm:$0xff]
      %v446 = vld [vmem:[%s5 + $0x468] sm:$0xff]
      %v447 = vld [vmem:[%s5 + $0x470] sm:$0xff]
      %v448 = vld [vmem:[%s5 + $0x478] sm:$0xff]
      %v449 = vld [vmem:[%s5 + $0x480] sm:$0xff]
      %v450 = vld [vmem:[%s5 + $0x488] sm:$0xff]
      %v451 = vld [vmem:[%s5 + $0x490] sm:$0xff]
      %v452 = vld [vmem:[%s5 + $0x498] sm:$0xff]
      %v453 = vld [vmem:[%s5 + $0x4a0] sm:$0xff]
      %v454 = vld [vmem:[%s5 + $0x4a8] sm:$0xff]
      %v455 = vld [vmem:[%s5 + $0x4b0] sm:$0xff]
      %v456 = vld [vmem:[%s5 + $0x4b8] sm:$0xff]
      %v457 = vld [vmem:[%s5 + $0x4c0] sm:$0xff]
      %v458 = vld [vmem:[%s5 + $0x4c8] sm:$0xff]
      %v459 = vld [vmem:[%s5 + $0x4d0] sm:$0xff]
      %v460 = vld [vmem:[%s5 + $0x4d8] sm:$0xff]
      %v461 = vld [vmem:[%s5 + $0x4e0] sm:$0xff]
      %v462 = vld [vmem:[%s5 + $0x4e8] sm:$0xff]
      %v463 = vld [vmem:[%s5 + $0x4f0] sm:$0xff]
      %v464 = vld [vmem:[%s5 + $0x4f8] sm:$0xff]
      %v465 = vld [vmem:[%s6] sm:$0xff]
      %v466 = vld [vmem:[%s6 + $0x8] sm:$0x3]
      %v469 = vperm.slane %v465, 0
      %v470 = vperm.slane %v465, 1
      %v471 = vperm.slane %v465, 2
      %v472 = vperm.slane %v465, 3
      %v473 = vperm.slane %v465, 4
      %v474 = vperm.slane %v465, 5
      %v475 = vperm.slane %v465, 6
      %v476 = vperm.slane %v465, 7
      %v477 = vperm.slane %v466, 0
      %v478 = vperm.slane %v466, 1
      %489 = vmatpush.msra.mxu0 %v455
      %490 = vmatpush.msra.mxu0 %v445
      %491 = vmatpush.msra.mxu0 %v435
      %492 = vmatpush.msra.mxu0 %v425
      %493 = vmatpush.msra.mxu0 %v415
      %494 = vmatpush.msra.mxu0 %v405
      %495 = vmatpush.msra.mxu0 %v395
      %496 = vmatpush.msra.mxu0 %v385
      %497 = vmatpush.msra.mxu0 %v375
      %498 = vmatpush.msra.mxu0 %v365
      %499 = vmatpush.msra.mxu0 %v355
      %500 = vmatpush.msra.mxu0 %v345
      %501 = vmatpush.msra.mxu0 %v335
      %502 = vmatpush.msra.mxu0 %v325
      %503 = vmatpush.msra.mxu0 %v315
      %504 = vmatpush.msra.mxu0 %v305
      %505 = vmatmul.f32.gmra.mxu0 %v304
      %v506 = vpop.f32.mrf.mxu0
      %v507 = vadd.f32 %v469, %v506
      %508 = vdwg.mxu0
      %509 = vmatpush.msra.mxu0 %v456
      %510 = vmatpush.msra.mxu0 %v446
      %511 = vmatpush.msra.mxu0 %v436
      %512 = vmatpush.msra.mxu0 %v426
      %513 = vmatpush.msra.mxu0 %v416
      %514 = vmatpush.msra.mxu0 %v406
      %515 = vmatpush.msra.mxu0 %v396
      %516 = vmatpush.msra.mxu0 %v386
      %517 = vmatpush.msra.mxu0 %v376
      %518 = vmatpush.msra.mxu0 %v366
      %519 = vmatpush.msra.mxu0 %v356
      %520 = vmatpush.msra.mxu0 %v346
      %521 = vmatpush.msra.mxu0 %v336
      %522 = vmatpush.msra.mxu0 %v326
      %523 = vmatpush.msra.mxu0 %v316
      %524 = vmatpush.msra.mxu0 %v306
      %525 = vmatmul.f32.gmra.mxu0 %v304
      %v526 = vpop.f32.mrf.mxu0
      %v527 = vadd.f32 %v470, %v526
      %528 = vdwg.mxu0
      %529 = vmatpush.msra.mxu0 %v457
      %530 = vmatpush.msra.mxu0 %v447
      %531 = vmatpush.msra.mxu0 %v437
      %532 = vmatpush.msra.mxu0 %v427
      %533 = vmatpush.msra.mxu0 %v417
      %534 = vmatpush.msra.mxu0 %v407
      %535 = vmatpush.msra.mxu0 %v397
      %536 = vmatpush.msra.mxu0 %v387
      %537 = vmatpush.msra.mxu0 %v377
      %538 = vmatpush.msra.mxu0 %v367
      %539 = vmatpush.msra.mxu0 %v357
      %540 = vmatpush.msra.mxu0 %v347
      %541 = vmatpush.msra.mxu0 %v337
      %542 = vmatpush.msra.mxu0 %v327
      %543 = vmatpush.msra.mxu0 %v317
      %544 = vmatpush.msra.mxu0 %v307
      %545 = vmatmul.f32.gmra.mxu0 %v304
      %v546 = vpop.f32.mrf.mxu0
      %v547 = vadd.f32 %v471, %v546
      %548 = vdwg.mxu0
      %549 = vmatpush.msra.mxu0 %v458
      %550 = vmatpush.msra.mxu0 %v448
      %551 = vmatpush.msra.mxu0 %v438
      %552 = vmatpush.msra.mxu0 %v428
      %553 = vmatpush.msra.mxu0 %v418
      %554 = vmatpush.msra.mxu0 %v408
      %555 = vmatpush.msra.mxu0 %v398
      %556 = vmatpush.msra.mxu0 %v388
      %557 = vmatpush.msra.mxu0 %v378
      %558 = vmatpush.msra.mxu0 %v368
      %559 = vmatpush.msra.mxu0 %v358
      %560 = vmatpush.msra.mxu0 %v348
      %561 = vmatpush.msra.mxu0 %v338
      %562 = vmatpush.msra.mxu0 %v328
      %563 = vmatpush.msra.mxu0 %v318
      %564 = vmatpush.msra.mxu0 %v308
      %565 = vmatmul.f32.gmra.mxu0 %v304
      %v566 = vpop.f32.mrf.mxu0
      %v567 = vadd.f32 %v472, %v566
      %568 = vdwg.mxu0
      %569 = vmatpush.msra.mxu0 %v459
      %570 = vmatpush.msra.mxu0 %v449
      %571 = vmatpush.msra.mxu0 %v439
      %572 = vmatpush.msra.mxu0 %v429
      %573 = vmatpush.msra.mxu0 %v419
      %574 = vmatpush.msra.mxu0 %v409
      %575 = vmatpush.msra.mxu0 %v399
      %576 = vmatpush.msra.mxu0 %v389
      %577 = vmatpush.msra.mxu0 %v379
      %578 = vmatpush.msra.mxu0 %v369
      %579 = vmatpush.msra.mxu0 %v359
      %580 = vmatpush.msra.mxu0 %v349
      %581 = vmatpush.msra.mxu0 %v339
      %582 = vmatpush.msra.mxu0 %v329
      %583 = vmatpush.msra.mxu0 %v319
      %584 = vmatpush.msra.mxu0 %v309
      %585 = vmatmul.f32.gmra.mxu0 %v304
      %v586 = vpop.f32.mrf.mxu0
      %v587 = vadd.f32 %v473, %v586
      %588 = vdwg.mxu0
      %589 = vmatpush.msra.mxu0 %v460
      %590 = vmatpush.msra.mxu0 %v450
      %591 = vmatpush.msra.mxu0 %v440
      %592 = vmatpush.msra.mxu0 %v430
      %593 = vmatpush.msra.mxu0 %v420
      %594 = vmatpush.msra.mxu0 %v410
      %595 = vmatpush.msra.mxu0 %v400
      %596 = vmatpush.msra.mxu0 %v390
      %597 = vmatpush.msra.mxu0 %v380
      %598 = vmatpush.msra.mxu0 %v370
      %599 = vmatpush.msra.mxu0 %v360
      %600 = vmatpush.msra.mxu0 %v350
      %601 = vmatpush.msra.mxu0 %v340
      %602 = vmatpush.msra.mxu0 %v330
      %603 = vmatpush.msra.mxu0 %v320
      %604 = vmatpush.msra.mxu0 %v310
      %605 = vmatmul.f32.gmra.mxu0 %v304
      %v606 = vpop.f32.mrf.mxu0
      %v607 = vadd.f32 %v474, %v606
      %608 = vdwg.mxu0
      %609 = vmatpush.msra.mxu0 %v461
      %610 = vmatpush.msra.mxu0 %v451
      %611 = vmatpush.msra.mxu0 %v441
      %612 = vmatpush.msra.mxu0 %v431
      %613 = vmatpush.msra.mxu0 %v421
      %614 = vmatpush.msra.mxu0 %v411
      %615 = vmatpush.msra.mxu0 %v401
      %616 = vmatpush.msra.mxu0 %v391
      %617 = vmatpush.msra.mxu0 %v381
      %618 = vmatpush.msra.mxu0 %v371
      %619 = vmatpush.msra.mxu0 %v361
      %620 = vmatpush.msra.mxu0 %v351
      %621 = vmatpush.msra.mxu0 %v341
      %622 = vmatpush.msra.mxu0 %v331
      %623 = vmatpush.msra.mxu0 %v321
      %624 = vmatpush.msra.mxu0 %v311
      %625 = vmatmul.f32.gmra.mxu0 %v304
      %v626 = vpop.f32.mrf.mxu0
      %v627 = vadd.f32 %v475, %v626
      %628 = vdwg.mxu0
      %629 = vmatpush.msra.mxu0 %v462
      %630 = vmatpush.msra.mxu0 %v452
      %631 = vmatpush.msra.mxu0 %v442
      %632 = vmatpush.msra.mxu0 %v432
      %633 = vmatpush.msra.mxu0 %v422
      %634 = vmatpush.msra.mxu0 %v412
      %635 = vmatpush.msra.mxu0 %v402
      %636 = vmatpush.msra.mxu0 %v392
      %637 = vmatpush.msra.mxu0 %v382
      %638 = vmatpush.msra.mxu0 %v372
      %639 = vmatpush.msra.mxu0 %v362
      %640 = vmatpush.msra.mxu0 %v352
      %641 = vmatpush.msra.mxu0 %v342
      %642 = vmatpush.msra.mxu0 %v332
      %643 = vmatpush.msra.mxu0 %v322
      %644 = vmatpush.msra.mxu0 %v312
      %645 = vmatmul.f32.gmra.mxu0 %v304
      %v646 = vpop.f32.mrf.mxu0
      %v647 = vadd.f32 %v476, %v646
      %648 = vdwg.mxu0
      %649 = vmatpush.msra.mxu0 %v463
      %650 = vmatpush.msra.mxu0 %v453
      %651 = vmatpush.msra.mxu0 %v443
      %652 = vmatpush.msra.mxu0 %v433
      %653 = vmatpush.msra.mxu0 %v423
      %654 = vmatpush.msra.mxu0 %v413
      %655 = vmatpush.msra.mxu0 %v403
      %656 = vmatpush.msra.mxu0 %v393
      %657 = vmatpush.msra.mxu0 %v383
      %658 = vmatpush.msra.mxu0 %v373
      %659 = vmatpush.msra.mxu0 %v363
      %660 = vmatpush.msra.mxu0 %v353
      %661 = vmatpush.msra.mxu0 %v343
      %662 = vmatpush.msra.mxu0 %v333
      %663 = vmatpush.msra.mxu0 %v323
      %664 = vmatpush.msra.mxu0 %v313
      %665 = vmatmul.f32.gmra.mxu0 %v304
      %v666 = vpop.f32.mrf.mxu0
      %v667 = vadd.f32 %v477, %v666
      %668 = vdwg.mxu0
      %669 = vmatpush.msra.mxu0 %v464
      %670 = vmatpush.msra.mxu0 %v454
      %671 = vmatpush.msra.mxu0 %v444
      %672 = vmatpush.msra.mxu0 %v434
      %673 = vmatpush.msra.mxu0 %v424
      %674 = vmatpush.msra.mxu0 %v414
      %675 = vmatpush.msra.mxu0 %v404
      %676 = vmatpush.msra.mxu0 %v394
      %677 = vmatpush.msra.mxu0 %v384
      %678 = vmatpush.msra.mxu0 %v374
      %679 = vmatpush.msra.mxu0 %v364
      %680 = vmatpush.msra.mxu0 %v354
      %681 = vmatpush.msra.mxu0 %v344
      %682 = vmatpush.msra.mxu0 %v334
      %683 = vmatpush.msra.mxu0 %v324
      %684 = vmatpush.msra.mxu0 %v314
      %685 = vmatmul.f32.gmra.mxu0 %v304
      %v686 = vpop.f32.mrf.mxu0
      %v687 = vadd.f32 %v478, %v686
      %688 = vdwg.mxu0
      %v689 = vmax.f32 %v507, 0.0
      %v690 = vmax.f32 %v527, 0.0
      %v691 = vmax.f32 %v547, 0.0
      %v692 = vmax.f32 %v567, 0.0
      %v693 = vmax.f32 %v587, 0.0
      %v694 = vmax.f32 %v607, 0.0
      %v695 = vmax.f32 %v627, 0.0
      %v696 = vmax.f32 %v647, 0.0
      %v697 = vmax.f32 %v667, 0.0
      %v698 = vmax.f32 %v687, 0.0
      %699 = vst [vmem:[%s275] sm:$0xff] %v689
      %700 = vst [vmem:[%s275 + $0x8] sm:$0xff] %v690
      %701 = vst [vmem:[%s275 + $0x10] sm:$0xff] %v691
      %702 = vst [vmem:[%s275 + $0x18] sm:$0xff] %v692
      %703 = vst [vmem:[%s275 + $0x20] sm:$0xff] %v693
      %704 = vst [vmem:[%s275 + $0x28] sm:$0xff] %v694
      %705 = vst [vmem:[%s275 + $0x30] sm:$0xff] %v695
      %706 = vst [vmem:[%s275 + $0x38] sm:$0xff] %v696
      %707 = vst [vmem:[%s275 + $0x40] sm:$0xff] %v697
      %vm708 = vcmask 392192
      %709 = vst.msk [vmem:[%s275 + $0x48] sm:$0xff] %vm708, %v698
      %p710 = scmp.lt.s32.totalorder %s18, 1
      %s711 = scalar_select %p710, %s18, 1
      %s712 = smul.addr %s711, 10
      %s713 = smul.addr %s712, 8
      %s714 = scalar_lea.vmem %s7, %s713
      // Predicated region
      $region49: #{dense_net_min_var.2} parent=47 // pred_check
        %p715 = pneg %p188
      $region50: #{dense_net_min_var.2} parent=47 // pred_check_branch
        %717 = sbr.rel (%p715) target = $region52
      $region51: #{dense_net_min_var.2} parent=47 // pred_region
        _
      $region52: #{dense_net_min_var.2} parent=47 // pred_fallthru
        _
    $region48: #{dense_net_min_var.2} parent=5 // pred_fallthru
      _
    %p718 = scmp.le.s32.totalorder 2, %s13
    // Predicated region
    $region53: #{dense_net_min_var.2} parent=5 // pred_check
      %p719 = pneg %p718
    $region54: #{dense_net_min_var.2} parent=5 // pred_check_branch
      %721 = sbr.rel (%p719) target = $region56
    $region55: #{dense_net_min_var.2} parent=5 // pred_region
      %s722 = ssub.s32 %s13, 2
      // Predicated region
      $region57: #{dense_net_min_var.2} parent=55 // pred_check
        %p723 = pneg %p194
      $region58: #{dense_net_min_var.2} parent=55 // pred_check_branch
        %725 = sbr.rel (%p723) target = $region60
      $region59: #{dense_net_min_var.2} parent=55 // pred_region
        %p726 = scmp.lt.s32.totalorder %s19, 1
        %s727 = scalar_select %p726, %s19, 1
        %s728 = smul.addr %s727, 10
        %s729 = smul.addr %s728, 8
        %s730 = scalar_lea.vmem %s7, %s729
      $region60: #{dense_net_min_var.2} parent=55 // pred_fallthru
        _
    $region56: #{dense_net_min_var.2} parent=5 // pred_fallthru
      _
  $region6: #{dense_net_min_var.2} parent=0 // loop_footer
    %s17 = sadd.s32 1, %s13
  $region7: #{dense_net_min_var.2} parent=0 // loop_footer_branch
    %12 = sbr.rel target = $region3
  $region8: #{dense_net_min_var.2} parent=0 // loop_exit
    _

// kernel: dense_net_min_var.3
$region0: #{dense_net_min_var.3}
  #allocation0 [shape = 'u32[]', space=smem, size = 0x4, offset = 0x4, fixed_abs, tag = 'smem constant byte address 0x4 - core index']
  #allocation1 [shape = 'u32[72,128]{1,0:T(1,128)}', space=vmem, size = 0x9000, scoped, tag = 'internal scratch']
  %s0 = inlined_call_operand.vmem [shape: f32[16,8,150], index: 0, kind: input, shape index: {}]
  %s1 = inlined_call_operand.vmem [shape: f32[16,8], index: 1, kind: output, shape index: {}]
  %s2 = sld [smem:[#allocation0]]
  $region44: #{dense_net_min_var.3} parent=0
    _
  %s4 = ssub.s32 1, %s2
  %s5 = scalar_select 0, %s4, %s2
  loop: start=0, step=1, limit=4
  $region2: #{dense_net_min_var.3} parent=0 // loop_pre_header
    _
  $region3: #{dense_net_min_var.3} parent=0 // loop_header
    %s7 = sphi 0, %s11
    %p8 = scmp.ge.s32.totalorder %s7, 4
    %s17 = sphi 0, %s19
    %s20 = sphi 0, %s17
    %s21 = sphi 0, %s20
    %s37 = sphi 0, %s21
    %s43 = sphi 0, %s45
    %s46 = sphi 0, %s43
    %s47 = sphi 0, %s46
    %s63 = sphi 0, %s47
  $region4: #{dense_net_min_var.3} parent=0 // loop_header_branch
    %10 = sbr.rel (%p8) target = $region8
  $region5: #{dense_net_min_var.3} parent=0 // loop_body
    %s12 = ssub.s32 %s7, 1
    %s13 = ssub.s32 %s7, 2
    %s14 = sadd.s32 %s7, 1
    %s15 = ssub.s32 %s7, %s14
    %p16 = scmp.eq.s32.totalorder %s15, 0
    %s18 = sadd.s32 %s17, 1
    %s19 = scalar_select %p16, %s17, %s18
    %p22 = pneg %p16
    %p23 = scmp.eq.s32.totalorder %s7, 1
    %p24 = por %p22, %p23
    %p25 = scmp.ne.s32.totalorder %s17, %s20
    %p26 = scmp.eq.s32.totalorder %s7, 0
    %p27 = por %p25, %p26
    %p28 = scmp.ne.s32.totalorder %s17, %s20
    %p29 = scmp.eq.s32.totalorder %s12, 1
    %p30 = por %p28, %p29
    %p31 = scmp.ne.s32.totalorder %s20, %s21
    %p32 = scmp.eq.s32.totalorder %s12, 0
    %p33 = por %p31, %p32
    %p34 = scmp.ne.s32.totalorder %s20, %s21
    %p35 = scmp.eq.s32.totalorder %s13, 1
    %p36 = por %p34, %p35
    %p38 = scmp.ne.s32.totalorder %s21, %s37
    %p39 = scmp.eq.s32.totalorder %s13, 0
    %p40 = por %p38, %p39
    %s41 = ssub.s32 %s7, %s14
    %p42 = scmp.eq.s32.totalorder %s41, 0
    %s44 = sadd.s32 %s43, 1
    %s45 = scalar_select %p42, %s43, %s44
    %p48 = pneg %p42
    %p49 = scmp.eq.s32.totalorder %s7, 1
    %p50 = por %p48, %p49
    %p51 = scmp.ne.s32.totalorder %s43, %s46
    %p52 = scmp.eq.s32.totalorder %s7, 0
    %p53 = por %p51, %p52
    %p54 = scmp.ne.s32.totalorder %s43, %s46
    %p55 = scmp.eq.s32.totalorder %s12, 1
    %p56 = por %p54, %p55
    %p57 = scmp.ne.s32.totalorder %s46, %s47
    %p58 = scmp.eq.s32.totalorder %s12, 0
    %p59 = por %p57, %p58
    %p60 = scmp.ne.s32.totalorder %s46, %s47
    %p61 = scmp.eq.s32.totalorder %s13, 1
    %p62 = por %p60, %p61
    %p64 = scmp.ne.s32.totalorder %s47, %s63
    %p65 = scmp.eq.s32.totalorder %s13, 0
    %p66 = por %p64, %p65
    %p67 = scmp.le.s32.totalorder 1, %s7
    %p68 = scmp.lt.s32.totalorder %s7, 3
    %p69 = pnand %p67, %p68
    %p70 = pneg %p69
    // Predicated region
    $region9: #{dense_net_min_var.3} parent=5 // pred_check
      _
    $region10: #{dense_net_min_var.3} parent=5 // pred_check_branch
      %72 = sbr.rel (%p69) target = $region12
    $region11: #{dense_net_min_var.3} parent=5 // pred_region
      %s73 = ssub.s32 %s7, 1
    $region12: #{dense_net_min_var.3} parent=5 // pred_fallthru
      _
    %p74 = scmp.lt.s32.totalorder %s7, 2
    // Predicated region
    $region13: #{dense_net_min_var.3} parent=5 // pred_check
      %p75 = pneg %p74
    $region14: #{dense_net_min_var.3} parent=5 // pred_check_branch
      %77 = sbr.rel (%p75) target = $region16
    $region15: #{dense_net_min_var.3} parent=5 // pred_region
      // Predicated region
      $region17: #{dense_net_min_var.3} parent=15 // pred_check
        %p78 = pneg %p27
      $region18: #{dense_net_min_var.3} parent=15 // pred_check_branch
        %80 = sbr.rel (%p78) target = $region20
      $region19: #{dense_net_min_var.3} parent=15 // pred_region
        %s81 = smul.u32 8, %s7
        %p82 = scmp.lt.s32.totalorder %s81, 15
        %s83 = scalar_select %p82, %s81, 15
        %s84 = smul.addr %s83, 2
        %s85 = smul.addr %s84, 8
        %s86 = scalar_lea.vmem %s0, %s85
        %s87 = smul.u32 8, %s7
      $region20: #{dense_net_min_var.3} parent=15 // pred_fallthru
        _
    $region16: #{dense_net_min_var.3} parent=5 // pred_fallthru
      _
    %p88 = scmp.le.s32.totalorder 1, %s7
    %p89 = scmp.lt.s32.totalorder %s7, 3
    %p90 = pnand %p88, %p89
    %p91 = pneg %p90
    // Predicated region
    $region21: #{dense_net_min_var.3} parent=5 // pred_check
      _
    $region22: #{dense_net_min_var.3} parent=5 // pred_check_branch
      %93 = sbr.rel (%p90) target = $region24
    $region23: #{dense_net_min_var.3} parent=5 // pred_region
      %s94 = ssub.s32 %s7, 1
      %s95 = smul.u32 8, %s12
      %p96 = scmp.lt.s32.totalorder %s95, 15
      %s97 = scalar_select %p96, %s95, 15
      %s98 = smul.addr %s97, 2
      %s99 = smul.addr %s98, 8
      %s100 = scalar_lea.vmem %s0, %s99
      %p101 = pneg %p33
      %p102 = pneg %p30
      %p103 = pneg %p59
      %p104 = pneg %p56
      %p105 = scmp.lt.s32.totalorder %s12, 1
      %s106 = scalar_select %p105, %s12, 1
      %s107 = smul.addr %s106, 8
      %s108 = scalar_lea.vmem %s1, %s107
      %s109 = smul.u32 8, %s12
      %p110 = scmp.lt.s32.totalorder %s109, 15
      %s111 = scalar_select %p110, %s109, 15
      %s112 = smul.addr %s111, 2
      %s113 = smul.addr %s112, 8
      %s114 = scalar_lea.vmem %s0, %s113
      %s115 = smul.u32 8, %s12
      %p116 = scmp.lt.s32.totalorder %s12, 1
      %s117 = scalar_select %p116, %s12, 1
      %s118 = smul.addr %s117, 8
      %s119 = scalar_lea.vmem %s1, %s118
      %v120 = vld [vmem:[%s114] sm:$0xff]
      %v121 = vld [vmem:[%s114 + $0x8] sm:$0xff]
      %v122 = vld [vmem:[%s114 + $0x10] sm:$0xff]
      %v123 = vld [vmem:[%s114 + $0x18] sm:$0xff]
      %v124 = vld [vmem:[%s114 + $0x20] sm:$0xff]
      %v125 = vld [vmem:[%s114 + $0x28] sm:$0xff]
      %v126 = vld [vmem:[%s114 + $0x30] sm:$0xff]
      %v127 = vld [vmem:[%s114 + $0x38] sm:$0xff]
      %v128 = vld [vmem:[%s114 + $0x40] sm:$0xff]
      %v129 = vld [vmem:[%s114 + $0x48] sm:$0xff]
      %v130 = vld [vmem:[%s114 + $0x50] sm:$0xff]
      %v131 = vld [vmem:[%s114 + $0x58] sm:$0xff]
      %v132 = vld [vmem:[%s114 + $0x60] sm:$0xff]
      %v133 = vld [vmem:[%s114 + $0x68] sm:$0xff]
      %v134 = vld [vmem:[%s114 + $0x70] sm:$0xff]
      %v135 = vld [vmem:[%s114 + $0x78] sm:$0xff]
      %vm136 = vcmask 179200
      %v137 = vsel %vm136, %v121, 0.0
      %v138 = vadd.f32 %v120, %v137
      %139 = vadd.xlane.f32.xlu0 %v138
      %v140 = vpop.xlane.xlu0 %139
      %v141 = vsel %vm136, %v123, 0.0
      %v142 = vadd.f32 %v122, %v141
      %143 = vadd.xlane.f32.xlu0 %v142
      %v144 = vpop.xlane.xlu0 %143
      %v145 = vsel %vm136, %v125, 0.0
      %v146 = vadd.f32 %v124, %v145
      %147 = vadd.xlane.f32.xlu0 %v146
      %v148 = vpop.xlane.xlu0 %147
      %v149 = vsel %vm136, %v127, 0.0
      %v150 = vadd.f32 %v126, %v149
      %151 = vadd.xlane.f32.xlu0 %v150
      %v152 = vpop.xlane.xlu0 %151
      %v153 = vsel %vm136, %v129, 0.0
      %v154 = vadd.f32 %v128, %v153
      %155 = vadd.xlane.f32.xlu0 %v154
      %v156 = vpop.xlane.xlu0 %155
      %v157 = vsel %vm136, %v131, 0.0
      %v158 = vadd.f32 %v130, %v157
      %159 = vadd.xlane.f32.xlu0 %v158
      %v160 = vpop.xlane.xlu0 %159
      %v161 = vsel %vm136, %v133, 0.0
      %v162 = vadd.f32 %v132, %v161
      %163 = vadd.xlane.f32.xlu0 %v162
      %v164 = vpop.xlane.xlu0 %163
      %v165 = vsel %vm136, %v135, 0.0
      %v166 = vadd.f32 %v134, %v165
      %167 = vadd.xlane.f32.xlu0 %v166
      %v168 = vpop.xlane.xlu0 %167
      %v169 = vrcp.pop 150.0
      %v170 = vmul.f32 150.0, %v169
      %v171 = vsub.f32 1.0, %v170
      %v172 = vmul.f32 %v169, %v171
      %v173 = vadd.f32 %v169, %v172
      %vm174 = vweird.f32 %v169
      %v175 = vsel %vm174, %v169, %v173
      %v176 = vmul.f32 %v140, %v175
      %v177 = vmul.f32 %v144, %v175
      %v178 = vmul.f32 %v148, %v175
      %v179 = vmul.f32 %v152, %v175
      %v180 = vmul.f32 %v156, %v175
      %v181 = vmul.f32 %v160, %v175
      %v182 = vmul.f32 %v164, %v175
      %v183 = vmul.f32 %v168, %v175
      %v184 = vsub.f32 %v120, %v176
      %v185 = vsub.f32 %v121, %v176
      %v186 = vsub.f32 %v122, %v177
      %v187 = vsub.f32 %v123, %v177
      %v188 = vsub.f32 %v124, %v178
      %v189 = vsub.f32 %v125, %v178
      %v190 = vsub.f32 %v126, %v179
      %v191 = vsub.f32 %v127, %v179
      %v192 = vsub.f32 %v128, %v180
      %v193 = vsub.f32 %v129, %v180
      %v194 = vsub.f32 %v130, %v181
      %v195 = vsub.f32 %v131, %v181
      %v196 = vsub.f32 %v132, %v182
      %v197 = vsub.f32 %v133, %v182
      %v198 = vsub.f32 %v134, %v183
      %v199 = vsub.f32 %v135, %v183
      %v201 = vsel %vm136, %v185, 0
      %203 = vmatpush.xpose.msra.mxu0 0.0
      %204 = vmatpush.xpose.msra.mxu0 0.0
      %205 = vmatpush.xpose.msra.mxu0 0.0
      %206 = vmatpush.xpose.msra.mxu0 0.0
      %207 = vmatpush.xpose.msra.mxu0 0.0
      %208 = vmatpush.xpose.msra.mxu0 0.0
      %209 = vmatpush.xpose.msra.mxu0 0.0
      %210 = vmatpush.xpose.msra.mxu0 0.0
      %211 = vmatpush.xpose.msra.mxu0 0.0
      %212 = vmatpush.xpose.msra.mxu0 0.0
      %213 = vmatpush.xpose.msra.mxu0 0.0
      %214 = vmatpush.xpose.msra.mxu0 0.0
      %215 = vmatpush.xpose.msra.mxu0 0.0
      %216 = vmatpush.xpose.msra.mxu0 0.0
      %217 = vmatpush.xpose.msra.mxu0 0.0
      %218 = vmatpush.xpose.msra.mxu0 %v184
      %219 = vmatmul.f32.gmra.mxu0 %v184
      %v220 = vpop.f32.mrf.mxu0
      %v221 = vadd.f32 0.0, %v220
      %222 = vdwg.mxu0
      %223 = vmatpush.xpose.msra.mxu0 0.0
      %224 = vmatpush.xpose.msra.mxu0 0.0
      %225 = vmatpush.xpose.msra.mxu0 0.0
      %226 = vmatpush.xpose.msra.mxu0 0.0
      %227 = vmatpush.xpose.msra.mxu0 0.0
      %228 = vmatpush.xpose.msra.mxu0 0.0
      %229 = vmatpush.xpose.msra.mxu0 0.0
      %230 = vmatpush.xpose.msra.mxu0 0.0
      %231 = vmatpush.xpose.msra.mxu0 0.0
      %232 = vmatpush.xpose.msra.mxu0 0.0
      %233 = vmatpush.xpose.msra.mxu0 0.0
      %234 = vmatpush.xpose.msra.mxu0 0.0
      %235 = vmatpush.xpose.msra.mxu0 0.0
      %236 = vmatpush.xpose.msra.mxu0 0.0
      %237 = vmatpush.xpose.msra.mxu0 0.0
      %238 = vmatpush.xpose.msra.mxu0 %v201
      %239 = vmatmul.f32.gmra.mxu0 %v201
      %v240 = vpop.f32.mrf.mxu0
      %v241 = vadd.f32 %v221, %v240
      %242 = vdwg.mxu0
      %v244 = vsel %vm136, %v187, 0
      %246 = vmatpush.xpose.msra.mxu0 0.0
      %247 = vmatpush.xpose.msra.mxu0 0.0
      %248 = vmatpush.xpose.msra.mxu0 0.0
      %249 = vmatpush.xpose.msra.mxu0 0.0
      %250 = vmatpush.xpose.msra.mxu0 0.0
      %251 = vmatpush.xpose.msra.mxu0 0.0
      %252 = vmatpush.xpose.msra.mxu0 0.0
      %253 = vmatpush.xpose.msra.mxu0 0.0
      %254 = vmatpush.xpose.msra.mxu0 0.0
      %255 = vmatpush.xpose.msra.mxu0 0.0
      %256 = vmatpush.xpose.msra.mxu0 0.0
      %257 = vmatpush.xpose.msra.mxu0 0.0
      %258 = vmatpush.xpose.msra.mxu0 0.0
      %259 = vmatpush.xpose.msra.mxu0 0.0
      %260 = vmatpush.xpose.msra.mxu0 0.0
      %261 = vmatpush.xpose.msra.mxu0 %v186
      %262 = vmatmul.f32.gmra.mxu0 %v186
      %v263 = vpop.f32.mrf.mxu0
      %v264 = vadd.f32 0.0, %v263
      %265 = vdwg.mxu0
      %266 = vmatpush.xpose.msra.mxu0 0.0
      %267 = vmatpush.xpose.msra.mxu0 0.0
      %268 = vmatpush.xpose.msra.mxu0 0.0
      %269 = vmatpush.xpose.msra.mxu0 0.0
      %270 = vmatpush.xpose.msra.mxu0 0.0
      %271 = vmatpush.xpose.msra.mxu0 0.0
      %272 = vmatpush.xpose.msra.mxu0 0.0
      %273 = vmatpush.xpose.msra.mxu0 0.0
      %274 = vmatpush.xpose.msra.mxu0 0.0
      %275 = vmatpush.xpose.msra.mxu0 0.0
      %276 = vmatpush.xpose.msra.mxu0 0.0
      %277 = vmatpush.xpose.msra.mxu0 0.0
      %278 = vmatpush.xpose.msra.mxu0 0.0
      %279 = vmatpush.xpose.msra.mxu0 0.0
      %280 = vmatpush.xpose.msra.mxu0 0.0
      %281 = vmatpush.xpose.msra.mxu0 %v244
      %282 = vmatmul.f32.gmra.mxu0 %v244
      %v283 = vpop.f32.mrf.mxu0
      %v284 = vadd.f32 %v264, %v283
      %285 = vdwg.mxu0
      %v287 = vsel %vm136, %v189, 0
      %289 = vmatpush.xpose.msra.mxu0 0.0
      %290 = vmatpush.xpose.msra.mxu0 0.0
      %291 = vmatpush.xpose.msra.mxu0 0.0
      %292 = vmatpush.xpose.msra.mxu0 0.0
      %293 = vmatpush.xpose.msra.mxu0 0.0
      %294 = vmatpush.xpose.msra.mxu0 0.0
      %295 = vmatpush.xpose.msra.mxu0 0.0
      %296 = vmatpush.xpose.msra.mxu0 0.0
      %297 = vmatpush.xpose.msra.mxu0 0.0
      %298 = vmatpush.xpose.msra.mxu0 0.0
      %299 = vmatpush.xpose.msra.mxu0 0.0
      %300 = vmatpush.xpose.msra.mxu0 0.0
      %301 = vmatpush.xpose.msra.mxu0 0.0
      %302 = vmatpush.xpose.msra.mxu0 0.0
      %303 = vmatpush.xpose.msra.mxu0 0.0
      %304 = vmatpush.xpose.msra.mxu0 %v188
      %305 = vmatmul.f32.gmra.mxu0 %v188
      %v306 = vpop.f32.mrf.mxu0
      %v307 = vadd.f32 0.0, %v306
      %308 = vdwg.mxu0
      %309 = vmatpush.xpose.msra.mxu0 0.0
      %310 = vmatpush.xpose.msra.mxu0 0.0
      %311 = vmatpush.xpose.msra.mxu0 0.0
      %312 = vmatpush.xpose.msra.mxu0 0.0
      %313 = vmatpush.xpose.msra.mxu0 0.0
      %314 = vmatpush.xpose.msra.mxu0 0.0
      %315 = vmatpush.xpose.msra.mxu0 0.0
      %316 = vmatpush.xpose.msra.mxu0 0.0
      %317 = vmatpush.xpose.msra.mxu0 0.0
      %318 = vmatpush.xpose.msra.mxu0 0.0
      %319 = vmatpush.xpose.msra.mxu0 0.0
      %320 = vmatpush.xpose.msra.mxu0 0.0
      %321 = vmatpush.xpose.msra.mxu0 0.0
      %322 = vmatpush.xpose.msra.mxu0 0.0
      %323 = vmatpush.xpose.msra.mxu0 0.0
      %324 = vmatpush.xpose.msra.mxu0 %v287
      %325 = vmatmul.f32.gmra.mxu0 %v287
      %v326 = vpop.f32.mrf.mxu0
      %v327 = vadd.f32 %v307, %v326
      %328 = vdwg.mxu0
      %v330 = vsel %vm136, %v191, 0
      %332 = vmatpush.xpose.msra.mxu0 0.0
      %333 = vmatpush.xpose.msra.mxu0 0.0
      %334 = vmatpush.xpose.msra.mxu0 0.0
      %335 = vmatpush.xpose.msra.mxu0 0.0
      %336 = vmatpush.xpose.msra.mxu0 0.0
      %337 = vmatpush.xpose.msra.mxu0 0.0
      %338 = vmatpush.xpose.msra.mxu0 0.0
      %339 = vmatpush.xpose.msra.mxu0 0.0
      %340 = vmatpush.xpose.msra.mxu0 0.0
      %341 = vmatpush.xpose.msra.mxu0 0.0
      %342 = vmatpush.xpose.msra.mxu0 0.0
      %343 = vmatpush.xpose.msra.mxu0 0.0
      %344 = vmatpush.xpose.msra.mxu0 0.0
      %345 = vmatpush.xpose.msra.mxu0 0.0
      %346 = vmatpush.xpose.msra.mxu0 0.0
      %347 = vmatpush.xpose.msra.mxu0 %v190
      %348 = vmatmul.f32.gmra.mxu0 %v190
      %v349 = vpop.f32.mrf.mxu0
      %v350 = vadd.f32 0.0, %v349
      %351 = vdwg.mxu0
      %352 = vmatpush.xpose.msra.mxu0 0.0
      %353 = vmatpush.xpose.msra.mxu0 0.0
      %354 = vmatpush.xpose.msra.mxu0 0.0
      %355 = vmatpush.xpose.msra.mxu0 0.0
      %356 = vmatpush.xpose.msra.mxu0 0.0
      %357 = vmatpush.xpose.msra.mxu0 0.0
      %358 = vmatpush.xpose.msra.mxu0 0.0
      %359 = vmatpush.xpose.msra.mxu0 0.0
      %360 = vmatpush.xpose.msra.mxu0 0.0
      %361 = vmatpush.xpose.msra.mxu0 0.0
      %362 = vmatpush.xpose.msra.mxu0 0.0
      %363 = vmatpush.xpose.msra.mxu0 0.0
      %364 = vmatpush.xpose.msra.mxu0 0.0
      %365 = vmatpush.xpose.msra.mxu0 0.0
      %366 = vmatpush.xpose.msra.mxu0 0.0
      %367 = vmatpush.xpose.msra.mxu0 %v330
      %368 = vmatmul.f32.gmra.mxu0 %v330
      %v369 = vpop.f32.mrf.mxu0
      %v370 = vadd.f32 %v350, %v369
      %371 = vdwg.mxu0
      %v373 = vsel %vm136, %v193, 0
      %375 = vmatpush.xpose.msra.mxu0 0.0
      %376 = vmatpush.xpose.msra.mxu0 0.0
      %377 = vmatpush.xpose.msra.mxu0 0.0
      %378 = vmatpush.xpose.msra.mxu0 0.0
      %379 = vmatpush.xpose.msra.mxu0 0.0
      %380 = vmatpush.xpose.msra.mxu0 0.0
      %381 = vmatpush.xpose.msra.mxu0 0.0
      %382 = vmatpush.xpose.msra.mxu0 0.0
      %383 = vmatpush.xpose.msra.mxu0 0.0
      %384 = vmatpush.xpose.msra.mxu0 0.0
      %385 = vmatpush.xpose.msra.mxu0 0.0
      %386 = vmatpush.xpose.msra.mxu0 0.0
      %387 = vmatpush.xpose.msra.mxu0 0.0
      %388 = vmatpush.xpose.msra.mxu0 0.0
      %389 = vmatpush.xpose.msra.mxu0 0.0
      %390 = vmatpush.xpose.msra.mxu0 %v192
      %391 = vmatmul.f32.gmra.mxu0 %v192
      %v392 = vpop.f32.mrf.mxu0
      %v393 = vadd.f32 0.0, %v392
      %394 = vdwg.mxu0
      %395 = vmatpush.xpose.msra.mxu0 0.0
      %396 = vmatpush.xpose.msra.mxu0 0.0
      %397 = vmatpush.xpose.msra.mxu0 0.0
      %398 = vmatpush.xpose.msra.mxu0 0.0
      %399 = vmatpush.xpose.msra.mxu0 0.0
      %400 = vmatpush.xpose.msra.mxu0 0.0
      %401 = vmatpush.xpose.msra.mxu0 0.0
      %402 = vmatpush.xpose.msra.mxu0 0.0
      %403 = vmatpush.xpose.msra.mxu0 0.0
      %404 = vmatpush.xpose.msra.mxu0 0.0
      %405 = vmatpush.xpose.msra.mxu0 0.0
      %406 = vmatpush.xpose.msra.mxu0 0.0
      %407 = vmatpush.xpose.msra.mxu0 0.0
      %408 = vmatpush.xpose.msra.mxu0 0.0
      %409 = vmatpush.xpose.msra.mxu0 0.0
      %410 = vmatpush.xpose.msra.mxu0 %v373
      %411 = vmatmul.f32.gmra.mxu0 %v373
      %v412 = vpop.f32.mrf.mxu0
      %v413 = vadd.f32 %v393, %v412
      %414 = vdwg.mxu0
      %v416 = vsel %vm136, %v195, 0
      %418 = vmatpush.xpose.msra.mxu0 0.0
      %419 = vmatpush.xpose.msra.mxu0 0.0
      %420 = vmatpush.xpose.msra.mxu0 0.0
      %421 = vmatpush.xpose.msra.mxu0 0.0
      %422 = vmatpush.xpose.msra.mxu0 0.0
      %423 = vmatpush.xpose.msra.mxu0 0.0
      %424 = vmatpush.xpose.msra.mxu0 0.0
      %425 = vmatpush.xpose.msra.mxu0 0.0
      %426 = vmatpush.xpose.msra.mxu0 0.0
      %427 = vmatpush.xpose.msra.mxu0 0.0
      %428 = vmatpush.xpose.msra.mxu0 0.0
      %429 = vmatpush.xpose.msra.mxu0 0.0
      %430 = vmatpush.xpose.msra.mxu0 0.0
      %431 = vmatpush.xpose.msra.mxu0 0.0
      %432 = vmatpush.xpose.msra.mxu0 0.0
      %433 = vmatpush.xpose.msra.mxu0 %v194
      %434 = vmatmul.f32.gmra.mxu0 %v194
      %v435 = vpop.f32.mrf.mxu0
      %v436 = vadd.f32 0.0, %v435
      %437 = vdwg.mxu0
      %438 = vmatpush.xpose.msra.mxu0 0.0
      %439 = vmatpush.xpose.msra.mxu0 0.0
      %440 = vmatpush.xpose.msra.mxu0 0.0
      %441 = vmatpush.xpose.msra.mxu0 0.0
      %442 = vmatpush.xpose.msra.mxu0 0.0
      %443 = vmatpush.xpose.msra.mxu0 0.0
      %444 = vmatpush.xpose.msra.mxu0 0.0
      %445 = vmatpush.xpose.msra.mxu0 0.0
      %446 = vmatpush.xpose.msra.mxu0 0.0
      %447 = vmatpush.xpose.msra.mxu0 0.0
      %448 = vmatpush.xpose.msra.mxu0 0.0
      %449 = vmatpush.xpose.msra.mxu0 0.0
      %450 = vmatpush.xpose.msra.mxu0 0.0
      %451 = vmatpush.xpose.msra.mxu0 0.0
      %452 = vmatpush.xpose.msra.mxu0 0.0
      %453 = vmatpush.xpose.msra.mxu0 %v416
      %454 = vmatmul.f32.gmra.mxu0 %v416
      %v455 = vpop.f32.mrf.mxu0
      %v456 = vadd.f32 %v436, %v455
      %457 = vdwg.mxu0
      %v459 = vsel %vm136, %v197, 0
      %461 = vmatpush.xpose.msra.mxu0 0.0
      %462 = vmatpush.xpose.msra.mxu0 0.0
      %463 = vmatpush.xpose.msra.mxu0 0.0
      %464 = vmatpush.xpose.msra.mxu0 0.0
      %465 = vmatpush.xpose.msra.mxu0 0.0
      %466 = vmatpush.xpose.msra.mxu0 0.0
      %467 = vmatpush.xpose.msra.mxu0 0.0
      %468 = vmatpush.xpose.msra.mxu0 0.0
      %469 = vmatpush.xpose.msra.mxu0 0.0
      %470 = vmatpush.xpose.msra.mxu0 0.0
      %471 = vmatpush.xpose.msra.mxu0 0.0
      %472 = vmatpush.xpose.msra.mxu0 0.0
      %473 = vmatpush.xpose.msra.mxu0 0.0
      %474 = vmatpush.xpose.msra.mxu0 0.0
      %475 = vmatpush.xpose.msra.mxu0 0.0
      %476 = vmatpush.xpose.msra.mxu0 %v196
      %477 = vmatmul.f32.gmra.mxu0 %v196
      %v478 = vpop.f32.mrf.mxu0
      %v479 = vadd.f32 0.0, %v478
      %480 = vdwg.mxu0
      %481 = vmatpush.xpose.msra.mxu0 0.0
      %482 = vmatpush.xpose.msra.mxu0 0.0
      %483 = vmatpush.xpose.msra.mxu0 0.0
      %484 = vmatpush.xpose.msra.mxu0 0.0
      %485 = vmatpush.xpose.msra.mxu0 0.0
      %486 = vmatpush.xpose.msra.mxu0 0.0
      %487 = vmatpush.xpose.msra.mxu0 0.0
      %488 = vmatpush.xpose.msra.mxu0 0.0
      %489 = vmatpush.xpose.msra.mxu0 0.0
      %490 = vmatpush.xpose.msra.mxu0 0.0
      %491 = vmatpush.xpose.msra.mxu0 0.0
      %492 = vmatpush.xpose.msra.mxu0 0.0
      %493 = vmatpush.xpose.msra.mxu0 0.0
      %494 = vmatpush.xpose.msra.mxu0 0.0
      %495 = vmatpush.xpose.msra.mxu0 0.0
      %496 = vmatpush.xpose.msra.mxu0 %v459
      %497 = vmatmul.f32.gmra.mxu0 %v459
      %v498 = vpop.f32.mrf.mxu0
      %v499 = vadd.f32 %v479, %v498
      %500 = vdwg.mxu0
      %v502 = vsel %vm136, %v199, 0
      %504 = vmatpush.xpose.msra.mxu0 0.0
      %505 = vmatpush.xpose.msra.mxu0 0.0
      %506 = vmatpush.xpose.msra.mxu0 0.0
      %507 = vmatpush.xpose.msra.mxu0 0.0
      %508 = vmatpush.xpose.msra.mxu0 0.0
      %509 = vmatpush.xpose.msra.mxu0 0.0
      %510 = vmatpush.xpose.msra.mxu0 0.0
      %511 = vmatpush.xpose.msra.mxu0 0.0
      %512 = vmatpush.xpose.msra.mxu0 0.0
      %513 = vmatpush.xpose.msra.mxu0 0.0
      %514 = vmatpush.xpose.msra.mxu0 0.0
      %515 = vmatpush.xpose.msra.mxu0 0.0
      %516 = vmatpush.xpose.msra.mxu0 0.0
      %517 = vmatpush.xpose.msra.mxu0 0.0
      %518 = vmatpush.xpose.msra.mxu0 0.0
      %519 = vmatpush.xpose.msra.mxu0 %v198
      %520 = vmatmul.f32.gmra.mxu0 %v198
      %v521 = vpop.f32.mrf.mxu0
      %v522 = vadd.f32 0.0, %v521
      %523 = vdwg.mxu0
      %524 = vmatpush.xpose.msra.mxu0 0.0
      %525 = vmatpush.xpose.msra.mxu0 0.0
      %526 = vmatpush.xpose.msra.mxu0 0.0
      %527 = vmatpush.xpose.msra.mxu0 0.0
      %528 = vmatpush.xpose.msra.mxu0 0.0
      %529 = vmatpush.xpose.msra.mxu0 0.0
      %530 = vmatpush.xpose.msra.mxu0 0.0
      %531 = vmatpush.xpose.msra.mxu0 0.0
      %532 = vmatpush.xpose.msra.mxu0 0.0
      %533 = vmatpush.xpose.msra.mxu0 0.0
      %534 = vmatpush.xpose.msra.mxu0 0.0
      %535 = vmatpush.xpose.msra.mxu0 0.0
      %536 = vmatpush.xpose.msra.mxu0 0.0
      %537 = vmatpush.xpose.msra.mxu0 0.0
      %538 = vmatpush.xpose.msra.mxu0 0.0
      %539 = vmatpush.xpose.msra.mxu0 %v502
      %540 = vmatmul.f32.gmra.mxu0 %v502
      %v541 = vpop.f32.mrf.mxu0
      %v542 = vadd.f32 %v522, %v541
      %543 = vdwg.mxu0
      %v544 = vmul.f32 %v241, 0.0067114094
      %v545 = vmul.f32 %v284, 0.0067114094
      %v546 = vmul.f32 %v327, 0.0067114094
      %v547 = vmul.f32 %v370, 0.0067114094
      %v548 = vmul.f32 %v413, 0.0067114094
      %v549 = vmul.f32 %v456, 0.0067114094
      %v550 = vmul.f32 %v499, 0.0067114094
      %v551 = vmul.f32 %v542, 0.0067114094
      %v552 = vlaneseq
      %v553 = vshrl.u32 %v552, 7
      %v554 = vlaneseq
      %v555 = vand.u32 %v554, 127
      %vm556 = vcmp.eq.s32.totalorder %v553, %v555
      %v557 = vsel %vm556, 1, 0
      %v558 = vcvt.s32.f32 %v557
      %v559 = vmul.f32 %v544, %v558
      %v560 = vmul.f32 %v545, %v558
      %v561 = vmul.f32 %v546, %v558
      %v562 = vmul.f32 %v547, %v558
      %v563 = vmul.f32 %v548, %v558
      %v564 = vmul.f32 %v549, %v558
      %v565 = vmul.f32 %v550, %v558
      %v566 = vmul.f32 %v551, %v558
      %vm567 = vcmask 64512
      %v568 = vsel %vm567, %v559, 0.0
      %569 = vadd.xlane.f32.xlu0 %v568
      %v570 = vpop.xlane.xlu0 %569
      %v571 = vsel %vm567, %v560, 0.0
      %572 = vadd.xlane.f32.xlu0 %v571
      %v573 = vpop.xlane.xlu0 %572
      %v574 = vsel %vm567, %v561, 0.0
      %575 = vadd.xlane.f32.xlu0 %v574
      %v576 = vpop.xlane.xlu0 %575
      %v577 = vsel %vm567, %v562, 0.0
      %578 = vadd.xlane.f32.xlu0 %v577
      %v579 = vpop.xlane.xlu0 %578
      %v580 = vsel %vm567, %v563, 0.0
      %581 = vadd.xlane.f32.xlu0 %v580
      %v582 = vpop.xlane.xlu0 %581
      %v583 = vsel %vm567, %v564, 0.0
      %584 = vadd.xlane.f32.xlu0 %v583
      %v585 = vpop.xlane.xlu0 %584
      %v586 = vsel %vm567, %v565, 0.0
      %587 = vadd.xlane.f32.xlu0 %v586
      %v588 = vpop.xlane.xlu0 %587
      %v589 = vsel %vm567, %v566, 0.0
      %590 = vadd.xlane.f32.xlu0 %v589
      %v591 = vpop.xlane.xlu0 %590
      %v600 = vperm.slane %v570, %v555
      %v601 = vperm.slane %v573, %v555
      %v602 = vperm.slane %v576, %v555
      %v603 = vperm.slane %v579, %v555
      %v604 = vperm.slane %v582, %v555
      %v605 = vperm.slane %v585, %v555
      %v606 = vperm.slane %v588, %v555
      %v607 = vperm.slane %v591, %v555
      %vm608 = vcmask 1041409
      %v609 = vsel %vm608, %v601, %v600
      %vm610 = vcmask 1042434
      %v611 = vsel %vm610, %v602, %v609
      %vm612 = vcmask 1043459
      %v613 = vsel %vm612, %v603, %v611
      %vm614 = vcmask 1044484
      %v615 = vsel %vm614, %v604, %v613
      %vm616 = vcmask 1045509
      %v617 = vsel %vm616, %v605, %v615
      %vm618 = vcmask 1046534
      %v619 = vsel %vm618, %v606, %v617
      %vm620 = vcmask 1047559
      %v621 = vsel %vm620, %v607, %v619
      %v623 = vsel %vm567, %v621, 0.0
      %624 = vadd.xlane.f32.xlu0 %v623
      %v625 = vpop.xlane.xlu0 %624
      %v626 = vmul.f32 %v625, 2.0
      %v627 = vadd.f32 %v626, 1e-06
      %v628 = vrcp.pop %v627
      %v629 = vmul.f32 %v627, %v628
      %v630 = vsub.f32 1.0, %v629
      %v631 = vmul.f32 %v628, %v630
      %v632 = vadd.f32 %v628, %v631
      %vm633 = vweird.f32 %v627
      %vm634 = vweird.f32 %v628
      %vm635 = vmor %vm633, %vm634
      %v636 = vsel %vm635, %v628, %v632
      %v637 = vand.u32 2147483647, %v627
      %vm638 = vcmp.eq.f32.partialorder %v637, 8.507059e+37
      %v639 = vand.u32 %v627, 2147483648
      %v640 = vor.u32 1.1754944e-38, %v639
      %v641 = vsel %vm638, %v640, %v636
      %v642 = vmul.f32 1.0, %v641
      %v643 = vmul.f32 %v544, 2.0
      %v644 = vmul.f32 %v545, 2.0
      %v645 = vmul.f32 %v546, 2.0
      %v646 = vmul.f32 %v547, 2.0
      %v647 = vmul.f32 %v548, 2.0
      %v648 = vmul.f32 %v549, 2.0
      %v649 = vmul.f32 %v550, 2.0
      %v650 = vmul.f32 %v551, 2.0
      loop: start=0, step=1, limit=300
      $region25: #{dense_net_min_var.3} parent=23 // loop_pre_header
        _
      $region26: #{dense_net_min_var.3} parent=23 // loop_header
        %s652 = sphi 0, %s656
        %p653 = scmp.ge.s32.totalorder %s652, 300
        %v657 = vphi 0.125, %v1060
      $region27: #{dense_net_min_var.3} parent=23 // loop_header_branch
        %655 = sbr.rel (%p653) target = $region31
      $region28: #{dense_net_min_var.3} parent=23 // loop_body
        %v659 = vrot.slane %v657, 1
        %v660 = vrot.slane %v657, 2
        %v661 = vrot.slane %v657, 3
        %v662 = vrot.slane %v657, 4
        %v663 = vrot.slane %v657, 5
        %v664 = vrot.slane %v657, 6
        %v665 = vrot.slane %v657, 7
        %v666 = vperm.slane %v657, 0
        %v667 = vperm.slane %v659, 0
        %v668 = vperm.slane %v660, 0
        %v669 = vperm.slane %v661, 0
        %v670 = vperm.slane %v662, 0
        %v671 = vperm.slane %v663, 0
        %v672 = vperm.slane %v664, 0
        %v673 = vperm.slane %v665, 0
        %v682 = vmul.f32 %v643, %v666
        %v683 = vmul.f32 %v644, %v667
        %v684 = vmul.f32 %v645, %v668
        %v685 = vmul.f32 %v646, %v669
        %v686 = vmul.f32 %v647, %v670
        %v687 = vmul.f32 %v648, %v671
        %v688 = vmul.f32 %v649, %v672
        %v689 = vmul.f32 %v650, %v673
        %v690 = vsel %vm567, %v682, 0.0
        %691 = vadd.xlane.f32.xlu0 %v690
        %v692 = vpop.xlane.xlu0 %691
        %v693 = vsel %vm567, %v683, 0.0
        %694 = vadd.xlane.f32.xlu0 %v693
        %v695 = vpop.xlane.xlu0 %694
        %v696 = vsel %vm567, %v684, 0.0
        %697 = vadd.xlane.f32.xlu0 %v696
        %v698 = vpop.xlane.xlu0 %697
        %v699 = vsel %vm567, %v685, 0.0
        %700 = vadd.xlane.f32.xlu0 %v699
        %v701 = vpop.xlane.xlu0 %700
        %v702 = vsel %vm567, %v686, 0.0
        %703 = vadd.xlane.f32.xlu0 %v702
        %v704 = vpop.xlane.xlu0 %703
        %v705 = vsel %vm567, %v687, 0.0
        %706 = vadd.xlane.f32.xlu0 %v705
        %v707 = vpop.xlane.xlu0 %706
        %v708 = vsel %vm567, %v688, 0.0
        %709 = vadd.xlane.f32.xlu0 %v708
        %v710 = vpop.xlane.xlu0 %709
        %v711 = vsel %vm567, %v689, 0.0
        %712 = vadd.xlane.f32.xlu0 %v711
        %v713 = vpop.xlane.xlu0 %712
        %v722 = vperm.slane %v692, %v555
        %v723 = vperm.slane %v695, %v555
        %v724 = vperm.slane %v698, %v555
        %v725 = vperm.slane %v701, %v555
        %v726 = vperm.slane %v704, %v555
        %v727 = vperm.slane %v707, %v555
        %v728 = vperm.slane %v710, %v555
        %v729 = vperm.slane %v713, %v555
        %v730 = vsel %vm608, %v723, %v722
        %v731 = vsel %vm610, %v724, %v730
        %v732 = vsel %vm612, %v725, %v731
        %v733 = vsel %vm614, %v726, %v732
        %v734 = vsel %vm616, %v727, %v733
        %v735 = vsel %vm618, %v728, %v734
        %v736 = vsel %vm620, %v729, %v735
        %v738 = vmul.f32 %v642, %v736
        %v739 = vsub.f32 %v657, %v738
        %v740 = vsel %vm567, %v739, inf
        %741 = vmin.xlane.f32.xlu0 %v740
        %v742 = vpop.xlane.xlu0 %741
        %v743 = vsub.f32 %v742, 1.0
        %v744 = vsel %vm567, %v739, -inf
        %745 = vmax.xlane.f32.xlu0 %v744
        %v746 = vpop.xlane.xlu0 %745
        %v747 = vadd.f32 %v746, 1.0
        %v748 = vadd.f32 %v743, %v747
        %v749 = vmul.f32 %v748, 0.5
        %v750 = vsub.f32 %v739, %v749
        %v751 = vmax.f32 %v750, -1.0
        %v752 = vmin.f32 %v751, 1.0
        %v753 = vsel %vm567, %v752, 0.0
        %754 = vadd.xlane.f32.xlu0 %v753
        %v755 = vpop.xlane.xlu0 %754
        %vm756 = vcmp.gt.f32.partialorder %v755, 1.0
        %v757 = vsel %vm756, %v749, %v743
        %v758 = vsel %vm756, %v747, %v749
        %v759 = vadd.f32 %v757, %v758
        %v760 = vmul.f32 %v759, 0.5
        %v761 = vsub.f32 %v739, %v760
        %v762 = vmax.f32 %v761, -1.0
        %v763 = vmin.f32 %v762, 1.0
        %v764 = vsel %vm567, %v763, 0.0
        %765 = vadd.xlane.f32.xlu0 %v764
        %v766 = vpop.xlane.xlu0 %765
        %vm767 = vcmp.gt.f32.partialorder %v766, 1.0
        %v768 = vsel %vm767, %v760, %v757
        %v769 = vsel %vm767, %v758, %v760
        %v770 = vadd.f32 %v768, %v769
        %v771 = vmul.f32 %v770, 0.5
        %v772 = vsub.f32 %v739, %v771
        %v773 = vmax.f32 %v772, -1.0
        %v774 = vmin.f32 %v773, 1.0
        %v775 = vsel %vm567, %v774, 0.0
        %776 = vadd.xlane.f32.xlu0 %v775
        %v777 = vpop.xlane.xlu0 %776
        %vm778 = vcmp.gt.f32.partialorder %v777, 1.0
        %v779 = vsel %vm778, %v771, %v768
        %v780 = vsel %vm778, %v769, %v771
        %v781 = vadd.f32 %v779, %v780
        %v782 = vmul.f32 %v781, 0.5
        %v783 = vsub.f32 %v739, %v782
        %v784 = vmax.f32 %v783, -1.0
        %v785 = vmin.f32 %v784, 1.0
        %v786 = vsel %vm567, %v785, 0.0
        %787 = vadd.xlane.f32.xlu0 %v786
        %v788 = vpop.xlane.xlu0 %787
        %vm789 = vcmp.gt.f32.partialorder %v788, 1.0
        %v790 = vsel %vm789, %v782, %v779
        %v791 = vsel %vm789, %v780, %v782
        %v792 = vadd.f32 %v790, %v791
        %v793 = vmul.f32 %v792, 0.5
        %v794 = vsub.f32 %v739, %v793
        %v795 = vmax.f32 %v794, -1.0
        %v796 = vmin.f32 %v795, 1.0
        %v797 = vsel %vm567, %v796, 0.0
        %798 = vadd.xlane.f32.xlu0 %v797
        %v799 = vpop.xlane.xlu0 %798
        %vm800 = vcmp.gt.f32.partialorder %v799, 1.0
        %v801 = vsel %vm800, %v793, %v790
        %v802 = vsel %vm800, %v791, %v793
        %v803 = vadd.f32 %v801, %v802
        %v804 = vmul.f32 %v803, 0.5
        %v805 = vsub.f32 %v739, %v804
        %v806 = vmax.f32 %v805, -1.0
        %v807 = vmin.f32 %v806, 1.0
        %v808 = vsel %vm567, %v807, 0.0
        %809 = vadd.xlane.f32.xlu0 %v808
        %v810 = vpop.xlane.xlu0 %809
        %vm811 = vcmp.gt.f32.partialorder %v810, 1.0
        %v812 = vsel %vm811, %v804, %v801
        %v813 = vsel %vm811, %v802, %v804
        %v814 = vadd.f32 %v812, %v813
        %v815 = vmul.f32 %v814, 0.5
        %v816 = vsub.f32 %v739, %v815
        %v817 = vmax.f32 %v816, -1.0
        %v818 = vmin.f32 %v817, 1.0
        %v819 = vsel %vm567, %v818, 0.0
        %820 = vadd.xlane.f32.xlu0 %v819
        %v821 = vpop.xlane.xlu0 %820
        %vm822 = vcmp.gt.f32.partialorder %v821, 1.0
        %v823 = vsel %vm822, %v815, %v812
        %v824 = vsel %vm822, %v813, %v815
        %v825 = vadd.f32 %v823, %v824
        %v826 = vmul.f32 %v825, 0.5
        %v827 = vsub.f32 %v739, %v826
        %v828 = vmax.f32 %v827, -1.0
        %v829 = vmin.f32 %v828, 1.0
        %v830 = vsel %vm567, %v829, 0.0
        %831 = vadd.xlane.f32.xlu0 %v830
        %v832 = vpop.xlane.xlu0 %831
        %vm833 = vcmp.gt.f32.partialorder %v832, 1.0
        %v834 = vsel %vm833, %v826, %v823
        %v835 = vsel %vm833, %v824, %v826
        %v836 = vadd.f32 %v834, %v835
        %v837 = vmul.f32 %v836, 0.5
        %v838 = vsub.f32 %v739, %v837
        %v839 = vmax.f32 %v838, -1.0
        %v840 = vmin.f32 %v839, 1.0
        %v841 = vsel %vm567, %v840, 0.0
        %842 = vadd.xlane.f32.xlu0 %v841
        %v843 = vpop.xlane.xlu0 %842
        %vm844 = vcmp.gt.f32.partialorder %v843, 1.0
        %v845 = vsel %vm844, %v837, %v834
        %v846 = vsel %vm844, %v835, %v837
        %v847 = vadd.f32 %v845, %v846
        %v848 = vmul.f32 %v847, 0.5
        %v849 = vsub.f32 %v739, %v848
        %v850 = vmax.f32 %v849, -1.0
        %v851 = vmin.f32 %v850, 1.0
        %v852 = vsel %vm567, %v851, 0.0
        %853 = vadd.xlane.f32.xlu0 %v852
        %v854 = vpop.xlane.xlu0 %853
        %vm855 = vcmp.gt.f32.partialorder %v854, 1.0
        %v856 = vsel %vm855, %v848, %v845
        %v857 = vsel %vm855, %v846, %v848
        %v858 = vadd.f32 %v856, %v857
        %v859 = vmul.f32 %v858, 0.5
        %v860 = vsub.f32 %v739, %v859
        %v861 = vmax.f32 %v860, -1.0
        %v862 = vmin.f32 %v861, 1.0
        %v863 = vsel %vm567, %v862, 0.0
        %864 = vadd.xlane.f32.xlu0 %v863
        %v865 = vpop.xlane.xlu0 %864
        %vm866 = vcmp.gt.f32.partialorder %v865, 1.0
        %v867 = vsel %vm866, %v859, %v856
        %v868 = vsel %vm866, %v857, %v859
        %v869 = vadd.f32 %v867, %v868
        %v870 = vmul.f32 %v869, 0.5
        %v871 = vsub.f32 %v739, %v870
        %v872 = vmax.f32 %v871, -1.0
        %v873 = vmin.f32 %v872, 1.0
        %v874 = vsel %vm567, %v873, 0.0
        %875 = vadd.xlane.f32.xlu0 %v874
        %v876 = vpop.xlane.xlu0 %875
        %vm877 = vcmp.gt.f32.partialorder %v876, 1.0
        %v878 = vsel %vm877, %v870, %v867
        %v879 = vsel %vm877, %v868, %v870
        %v880 = vadd.f32 %v878, %v879
        %v881 = vmul.f32 %v880, 0.5
        %v882 = vsub.f32 %v739, %v881
        %v883 = vmax.f32 %v882, -1.0
        %v884 = vmin.f32 %v883, 1.0
        %v885 = vsel %vm567, %v884, 0.0
        %886 = vadd.xlane.f32.xlu0 %v885
        %v887 = vpop.xlane.xlu0 %886
        %vm888 = vcmp.gt.f32.partialorder %v887, 1.0
        %v889 = vsel %vm888, %v881, %v878
        %v890 = vsel %vm888, %v879, %v881
        %v891 = vadd.f32 %v889, %v890
        %v892 = vmul.f32 %v891, 0.5
        %v893 = vsub.f32 %v739, %v892
        %v894 = vmax.f32 %v893, -1.0
        %v895 = vmin.f32 %v894, 1.0
        %v896 = vsel %vm567, %v895, 0.0
        %897 = vadd.xlane.f32.xlu0 %v896
        %v898 = vpop.xlane.xlu0 %897
        %vm899 = vcmp.gt.f32.partialorder %v898, 1.0
        %v900 = vsel %vm899, %v892, %v889
        %v901 = vsel %vm899, %v890, %v892
        %v902 = vadd.f32 %v900, %v901
        %v903 = vmul.f32 %v902, 0.5
        %v904 = vsub.f32 %v739, %v903
        %v905 = vmax.f32 %v904, -1.0
        %v906 = vmin.f32 %v905, 1.0
        %v907 = vsel %vm567, %v906, 0.0
        %908 = vadd.xlane.f32.xlu0 %v907
        %v909 = vpop.xlane.xlu0 %908
        %vm910 = vcmp.gt.f32.partialorder %v909, 1.0
        %v911 = vsel %vm910, %v903, %v900
        %v912 = vsel %vm910, %v901, %v903
        %v913 = vadd.f32 %v911, %v912
        %v914 = vmul.f32 %v913, 0.5
        %v915 = vsub.f32 %v739, %v914
        %v916 = vmax.f32 %v915, -1.0
        %v917 = vmin.f32 %v916, 1.0
        %v918 = vsel %vm567, %v917, 0.0
        %919 = vadd.xlane.f32.xlu0 %v918
        %v920 = vpop.xlane.xlu0 %919
        %vm921 = vcmp.gt.f32.partialorder %v920, 1.0
        %v922 = vsel %vm921, %v914, %v911
        %v923 = vsel %vm921, %v912, %v914
        %v924 = vadd.f32 %v922, %v923
        %v925 = vmul.f32 %v924, 0.5
        %v926 = vsub.f32 %v739, %v925
        %v927 = vmax.f32 %v926, -1.0
        %v928 = vmin.f32 %v927, 1.0
        %v929 = vsel %vm567, %v928, 0.0
        %930 = vadd.xlane.f32.xlu0 %v929
        %v931 = vpop.xlane.xlu0 %930
        %vm932 = vcmp.gt.f32.partialorder %v931, 1.0
        %v933 = vsel %vm932, %v925, %v922
        %v934 = vsel %vm932, %v923, %v925
        %v935 = vadd.f32 %v933, %v934
        %v936 = vmul.f32 %v935, 0.5
        %v937 = vsub.f32 %v739, %v936
        %v938 = vmax.f32 %v937, -1.0
        %v939 = vmin.f32 %v938, 1.0
        %v940 = vsel %vm567, %v939, 0.0
        %941 = vadd.xlane.f32.xlu0 %v940
        %v942 = vpop.xlane.xlu0 %941
        %vm943 = vcmp.gt.f32.partialorder %v942, 1.0
        %v944 = vsel %vm943, %v936, %v933
        %v945 = vsel %vm943, %v934, %v936
        %v946 = vadd.f32 %v944, %v945
        %v947 = vmul.f32 %v946, 0.5
        %v948 = vsub.f32 %v739, %v947
        %v949 = vmax.f32 %v948, -1.0
        %v950 = vmin.f32 %v949, 1.0
        %v951 = vsel %vm567, %v950, 0.0
        %952 = vadd.xlane.f32.xlu0 %v951
        %v953 = vpop.xlane.xlu0 %952
        %vm954 = vcmp.gt.f32.partialorder %v953, 1.0
        %v955 = vsel %vm954, %v947, %v944
        %v956 = vsel %vm954, %v945, %v947
        %v957 = vadd.f32 %v955, %v956
        %v958 = vmul.f32 %v957, 0.5
        %v959 = vsub.f32 %v739, %v958
        %v960 = vmax.f32 %v959, -1.0
        %v961 = vmin.f32 %v960, 1.0
        %v962 = vsel %vm567, %v961, 0.0
        %963 = vadd.xlane.f32.xlu0 %v962
        %v964 = vpop.xlane.xlu0 %963
        %vm965 = vcmp.gt.f32.partialorder %v964, 1.0
        %v966 = vsel %vm965, %v958, %v955
        %v967 = vsel %vm965, %v956, %v958
        %v968 = vadd.f32 %v966, %v967
        %v969 = vmul.f32 %v968, 0.5
        %v970 = vsub.f32 %v739, %v969
        %v971 = vmax.f32 %v970, -1.0
        %v972 = vmin.f32 %v971, 1.0
        %v973 = vsel %vm567, %v972, 0.0
        %974 = vadd.xlane.f32.xlu0 %v973
        %v975 = vpop.xlane.xlu0 %974
        %vm976 = vcmp.gt.f32.partialorder %v975, 1.0
        %v977 = vsel %vm976, %v969, %v966
        %v978 = vsel %vm976, %v967, %v969
        %v979 = vadd.f32 %v977, %v978
        %v980 = vmul.f32 %v979, 0.5
        %v981 = vsub.f32 %v739, %v980
        %v982 = vmax.f32 %v981, -1.0
        %v983 = vmin.f32 %v982, 1.0
        %v984 = vsel %vm567, %v983, 0.0
        %985 = vadd.xlane.f32.xlu0 %v984
        %v986 = vpop.xlane.xlu0 %985
        %vm987 = vcmp.gt.f32.partialorder %v986, 1.0
        %v988 = vsel %vm987, %v980, %v977
        %v989 = vsel %vm987, %v978, %v980
        %v990 = vadd.f32 %v988, %v989
        %v991 = vmul.f32 %v990, 0.5
        %v992 = vsub.f32 %v739, %v991
        %v993 = vmax.f32 %v992, -1.0
        %v994 = vmin.f32 %v993, 1.0
        %v995 = vsel %vm567, %v994, 0.0
        %996 = vadd.xlane.f32.xlu0 %v995
        %v997 = vpop.xlane.xlu0 %996
        %vm998 = vcmp.gt.f32.partialorder %v997, 1.0
        %v999 = vsel %vm998, %v991, %v988
        %v1000 = vsel %vm998, %v989, %v991
        %v1001 = vadd.f32 %v999, %v1000
        %v1002 = vmul.f32 %v1001, 0.5
        %v1003 = vsub.f32 %v739, %v1002
        %v1004 = vmax.f32 %v1003, -1.0
        %v1005 = vmin.f32 %v1004, 1.0
        %v1006 = vsel %vm567, %v1005, 0.0
        %1007 = vadd.xlane.f32.xlu0 %v1006
        %v1008 = vpop.xlane.xlu0 %1007
        %vm1009 = vcmp.gt.f32.partialorder %v1008, 1.0
        %v1010 = vsel %vm1009, %v1002, %v999
        %v1011 = vsel %vm1009, %v1000, %v1002
        %v1012 = vadd.f32 %v1010, %v1011
        %v1013 = vmul.f32 %v1012, 0.5
        %v1014 = vsub.f32 %v739, %v1013
        %v1015 = vmax.f32 %v1014, -1.0
        %v1016 = vmin.f32 %v1015, 1.0
        %v1017 = vsel %vm567, %v1016, 0.0
        %1018 = vadd.xlane.f32.xlu0 %v1017
        %v1019 = vpop.xlane.xlu0 %1018
        %vm1020 = vcmp.gt.f32.partialorder %v1019, 1.0
        %v1021 = vsel %vm1020, %v1013, %v1010
        %v1022 = vsel %vm1020, %v1011, %v1013
        %v1023 = vadd.f32 %v1021, %v1022
        %v1024 = vmul.f32 %v1023, 0.5
        %v1025 = vsub.f32 %v739, %v1024
        %v1026 = vmax.f32 %v1025, -1.0
        %v1027 = vmin.f32 %v1026, 1.0
        %v1028 = vsel %vm567, %v1027, 0.0
        %1029 = vadd.xlane.f32.xlu0 %v1028
        %v1030 = vpop.xlane.xlu0 %1029
        %vm1031 = vcmp.gt.f32.partialorder %v1030, 1.0
        %v1032 = vsel %vm1031, %v1024, %v1021
        %v1033 = vsel %vm1031, %v1022, %v1024
        %v1034 = vadd.f32 %v1032, %v1033
        %v1035 = vmul.f32 %v1034, 0.5
        %v1036 = vsub.f32 %v739, %v1035
        %v1037 = vmax.f32 %v1036, -1.0
        %v1038 = vmin.f32 %v1037, 1.0
        %v1039 = vsel %vm567, %v1038, 0.0
        %1040 = vadd.xlane.f32.xlu0 %v1039
        %v1041 = vpop.xlane.xlu0 %1040
        %vm1042 = vcmp.gt.f32.partialorder %v1041, 1.0
        %v1043 = vsel %vm1042, %v1035, %v1032
        %v1044 = vsel %vm1042, %v1033, %v1035
        %v1045 = vadd.f32 %v1043, %v1044
        %v1046 = vmul.f32 %v1045, 0.5
        %v1047 = vsub.f32 %v739, %v1046
        %v1048 = vmax.f32 %v1047, -1.0
        %v1049 = vmin.f32 %v1048, 1.0
        %v1050 = vsel %vm567, %v1049, 0.0
        %1051 = vadd.xlane.f32.xlu0 %v1050
        %v1052 = vpop.xlane.xlu0 %1051
        %vm1053 = vcmp.gt.f32.partialorder %v1052, 1.0
        %v1054 = vsel %vm1053, %v1046, %v1043
        %v1055 = vsel %vm1053, %v1044, %v1046
        %v1056 = vadd.f32 %v1054, %v1055
        %v1057 = vmul.f32 %v1056, 0.5
        %v1058 = vsub.f32 %v739, %v1057
        %v1059 = vmax.f32 %v1058, -1.0
        %v1060 = vmin.f32 %v1059, 1.0
      $region29: #{dense_net_min_var.3} parent=23 // loop_footer
        %s656 = sadd.s32 1, %s652
      $region30: #{dense_net_min_var.3} parent=23 // loop_footer_branch
        %651 = sbr.rel target = $region26
      $region31: #{dense_net_min_var.3} parent=23 // loop_exit
        _
      %1061 = vst.msk [vmem:[%s119] sm:$0xff] %vm567, %v657
      %p1062 = scmp.lt.s32.totalorder %s12, 1
      %s1063 = scalar_select %p1062, %s12, 1
      %s1064 = smul.addr %s1063, 8
      %s1065 = scalar_lea.vmem %s1, %s1064
      // Predicated region
      $region32: #{dense_net_min_var.3} parent=23 // pred_check
        %p1066 = pneg %p56
      $region33: #{dense_net_min_var.3} parent=23 // pred_check_branch
        %1068 = sbr.rel (%p1066) target = $region35
      $region34: #{dense_net_min_var.3} parent=23 // pred_region
        _
      $region35: #{dense_net_min_var.3} parent=23 // pred_fallthru
        _
    $region24: #{dense_net_min_var.3} parent=5 // pred_fallthru
      _
    %p1069 = scmp.le.s32.totalorder 2, %s7
    // Predicated region
    $region36: #{dense_net_min_var.3} parent=5 // pred_check
      %p1070 = pneg %p1069
    $region37: #{dense_net_min_var.3} parent=5 // pred_check_branch
      %1072 = sbr.rel (%p1070) target = $region39
    $region38: #{dense_net_min_var.3} parent=5 // pred_region
      %s1073 = ssub.s32 %s7, 2
      // Predicated region
      $region40: #{dense_net_min_var.3} parent=38 // pred_check
        %p1074 = pneg %p62
      $region41: #{dense_net_min_var.3} parent=38 // pred_check_branch
        %1076 = sbr.rel (%p1074) target = $region43
      $region42: #{dense_net_min_var.3} parent=38 // pred_region
        %p1077 = scmp.lt.s32.totalorder %s13, 1
        %s1078 = scalar_select %p1077, %s13, 1
        %s1079 = smul.addr %s1078, 8
        %s1080 = scalar_lea.vmem %s1, %s1079
      $region43: #{dense_net_min_var.3} parent=38 // pred_fallthru
        _
    $region39: #{dense_net_min_var.3} parent=5 // pred_fallthru
      _
  $region6: #{dense_net_min_var.3} parent=0 // loop_footer
    %s11 = sadd.s32 1, %s7
  $region7: #{dense_net_min_var.3} parent=0 // loop_footer_branch
    %6 = sbr.rel target = $region3
  $region8: #{dense_net_min_var.3} parent=0 // loop_exit
    _

</llo_original>
